<compile_context>
chip_gen: v7x
topology: tpu7x:2x2x1
jax: 0.10.0
libtpu: 0.0.40
codegen_flags: <defaults>
</compile_context>

<pallas_src>
import jax
import jax.numpy as jnp
from jax.experimental import pallas as pl
from jax.experimental.pallas import tpu as pltpu

# Scaled-down channel sizes (structure identical to the PyTorch module).
PN_DIMS = (3, 8, 8, 8, 16, 32)          # PointNet per-point MLP (ReLU after each)
EMB = PN_DIMS[-1]                       # template_feature_size = source_feature_size
H3_DIMS = (2 * EMB, 32, 16, 16, 8, 1)   # h3: Conv-ReLU x4, Conv, Sigmoid
N_PN = len(PN_DIMS) - 1                 # 5
N_H3 = len(H3_DIMS) - 1                 # 5


def _rup8(x):
    return ((x + 7) // 8) * 8


# Packed slab layout: 5 PointNet layers, then the SPLIT first h3 layer
# (template half carries the bias, pooled half has a zero bias), then the
# remaining 4 h3 layers.  Each entry is a transposed weight (C_out, C_in)
# zero-padded into a (CMAX, CMAX) slot (padding is zero so the math is exact).
ENTRY_DIMS = tuple(
    [(PN_DIMS[i + 1], PN_DIMS[i]) for i in range(N_PN)]
    + [(H3_DIMS[1], EMB), (H3_DIMS[1], EMB)]
    + [(H3_DIMS[i + 1], H3_DIMS[i]) for i in range(1, N_H3)]
)
ENTRY_PAD = tuple((_rup8(co), _rup8(ci)) for co, ci in ENTRY_DIMS)
N_ENTRIES = len(ENTRY_DIMS)                 # 11
CMAX = max(max(p) for p in ENTRY_PAD)       # 32
CIN0 = ENTRY_PAD[0][1]                      # 8  (xyz channels padded 3 -> 8)
IDX_H3T = N_PN                              # 5: h3 layer-1, template half (+ bias)
IDX_H3P = N_PN + 1                          # 6: h3 layer-1, pooled half (zero bias)
EMB_P = ENTRY_PAD[N_PN - 1][0]              # padded PointNet output channels (32)


def _make_kernel(n_real, n_pad, bt):
    """Kernel over one batch tile: bt items, n_pad (128-aligned) points each."""
    bt_np = bt * n_pad

    def kernel(x_ref, w_ref, b_ref, out_ref):
        def dense(idx, x):
            co, ci = ENTRY_PAD[idx]
            w = w_ref[idx, :co, :ci]                      # bf16, static ref slice
            if x.dtype != jnp.bfloat16:
                x = x.astype(jnp.bfloat16)
            y = jnp.dot(w, x, preferred_element_type=jnp.float32)
            return y + b_ref[idx, :co, :]                 # bias add in f32

        # Shared PointNet MLP on the pre-interleaved [template | source] tile.
        x = x_ref[...]                                    # (CIN0, 2*bt_np) bf16
        for l in range(N_PN):
            x = jnp.maximum(dense(l, x), 0.0)
        t_feat = x[:, :bt_np]                             # (EMB_P, bt_np) template
        s_feat = x[:, bt_np:]                             # (EMB_P, bt_np) source

        # Per-item max-pool over source points: one masked select + one
        # lane-axis reduction over the (EMB_P, bt, n_pad) view.  Padded
        # SOURCE points are masked out so the math matches the unpadded
        # module exactly (assumes every item has >= 1 real point).
        s3 = s_feat.reshape(EMB_P, bt, n_pad)
        if n_real < n_pad:
            lane = jax.lax.broadcasted_iota(jnp.int32, (1, 1, n_pad), 2)
            s3 = jnp.where(lane < n_real, s3, jnp.float32(-1e30))
        pooled = jnp.max(s3, axis=-1)                     # (EMB_P, bt)

        # h3 layer 1 with split weight: W1t @ t_feat + broadcast(W1p @ pooled),
        # with the broadcast folded into a rank-1 add on the (h1p, bt, n_pad)
        # view (no (h1p, bt_np) temporary, no per-item broadcast/concat).
        h1p = ENTRY_PAD[IDX_H3T][0]
        pool_term = dense(IDX_H3P, pooled)                # (h1p, bt), zero bias
        th = dense(IDX_H3T, t_feat).reshape(h1p, bt, n_pad)
        h = jnp.maximum(th + pool_term[:, :, None], 0.0).reshape(h1p, bt_np)

        # Remaining h3 layers: ReLU between, final layer + Sigmoid.
        for l in range(IDX_H3P + 1, N_ENTRIES - 1):
            h = jnp.maximum(dense(l, h), 0.0)
        h = dense(N_ENTRIES - 1, h)                       # (8, bt_np); row 0 = logit
        out_ref[...] = jax.nn.sigmoid(h[0:1, :])          # lane-dense (1, bt_np) store

    return kernel


def init_params(key):
    """Deterministic synthetic weights, natural (C_in, C_out) orientation."""
    params = []
    dims = list(zip(PN_DIMS[:-1], PN_DIMS[1:])) + list(zip(H3_DIMS[:-1], H3_DIMS[1:]))
    for cin, cout in dims:
        key, kw, kb = jax.random.split(key, 3)
        w = jax.random.normal(kw, (cin, cout), jnp.float32) / jnp.sqrt(float(cin))
        b = jax.random.normal(kb, (1, cout), jnp.float32) * 0.01
        params.append((w, b))
    return params


def _pack_params(params):
    """Transpose, split the first h3 weight, zero-pad, stack; weights -> bf16."""
    pn, h3 = params[:N_PN], params[N_PN:]
    w1, b1 = h3[0]
    entries = [(w.T, b.reshape(-1)) for w, b in pn]
    entries.append((w1[:EMB].T, b1.reshape(-1)))                          # template half
    entries.append((w1[EMB:].T, jnp.zeros((w1.shape[1],), jnp.float32)))  # pooled half
    entries.extend((w.T, b.reshape(-1)) for w, b in h3[1:])

    w_slab = jnp.zeros((N_ENTRIES, CMAX, CMAX), jnp.float32)
    b_slab = jnp.zeros((N_ENTRIES, CMAX, 1), jnp.float32)
    for i, (wt, bb) in enumerate(entries):
        co, ci = wt.shape
        w_slab = w_slab.at[i, :co, :ci].set(wt)
        b_slab = b_slab.at[i, :co, 0].set(bb)
    return w_slab.astype(jnp.bfloat16), b_slab


def _choose_tiling(B, n_pad):
    """Pick batch-tile size bt, grid length and a VMEM limit per generation."""
    kind = jax.devices()[0].device_kind.lower()
    two_tc = "v7" in kind                                 # v7x: 2 TensorCores/chip
    try:
        vmem_phys = int(pltpu.get_tpu_info().vmem_capacity_bytes)
    except Exception:
        vmem_phys = (64 if two_tc else 128) * 1024 * 1024
    # Live-VMEM per (bt * n_pad) lane: double-buffered bf16 input tile (64 B)
    # + f32 output (8 B) + a few (<=32, lanes) / (<=32, 2*lanes) f32
    # activation temporaries (~1.4 KB).
    bytes_per_lane = 1536
    budget = 24 * 1024 * 1024 if two_tc else 48 * 1024 * 1024
    budget = min(budget, vmem_phys // 2)
    max_bt = max(1, budget // (bytes_per_lane * n_pad))
    bt = max(1, min(B, max_bt))
    if two_tc and B >= 2:
        # Keep >= 2 (preferably >= 4) balanced "parallel" steps for the 2 TCs.
        target_steps = 4 if B >= 4 else 2
        bt = min(bt, max(1, pl.cdiv(B, target_steps)))
    grid = pl.cdiv(B, bt)
    if two_tc and grid % 2:
        grid += 1                                         # even split across TCs
    vmem_limit = int(min(vmem_phys * 3 // 4, 100 * 1024 * 1024))
    return bt, grid, vmem_limit


def pointnet_mask(template, source, params):
    """template, source: (B, N, 3) float32.  Returns mask: (B, N) float32."""
    B, N, _ = template.shape
    n_pad = ((N + 127) // 128) * 128          # lane-align the point axis
    bt, grid, vmem_limit = _choose_tiling(B, n_pad)
    b_pad = grid * bt                          # pad B up instead of shrinking bt
    bt_np = bt * n_pad

    def to_cf(pc):                             # (B, N, 3) -> (3, grid, bt*n_pad)
        pc = jnp.pad(pc, ((0, b_pad - B), (0, n_pad - N), (0, 0)))
        return jnp.transpose(pc, (2, 0, 1)).reshape(3, grid, bt_np)

    # Pre-interleave [template_tile_i | source_tile_i] host-side so each grid
    # step does a single lane-dense bf16 load (no in-kernel concatenate).
    t3, s3 = to_cf(template), to_cf(source)
    x = jnp.concatenate([t3[:, :, None, :], s3[:, :, None, :]], axis=2)
    x = x.reshape(3, grid * 2 * bt_np)
    x = jnp.pad(x, ((0, CIN0 - 3), (0, 0))).astype(jnp.bfloat16)

    w_slab, b_slab = _pack_params(params)

    out = pl.pallas_call(
        _make_kernel(N, n_pad, bt),
        out_shape=jax.ShapeDtypeStruct((1, grid * bt_np), jnp.float32),
        grid_spec=pltpu.PrefetchScalarGridSpec(
            num_scalar_prefetch=0,
            grid=(grid,),
            in_specs=[
                # Interleaved activations: bf16, CIN0 is the full sublane dim.
                pl.BlockSpec((CIN0, 2 * bt_np), lambda i: (0, i)),
                # Parameter slabs: full-array blocks with a constant block
                # index, so they are DMA'd once and stay VMEM-resident.
                pl.BlockSpec((N_ENTRIES, CMAX, CMAX), lambda i: (0, 0, 0)),
                pl.BlockSpec((N_ENTRIES, CMAX, 1), lambda i: (0, 0, 0)),
            ],
            out_specs=pl.BlockSpec((1, bt_np), lambda i: (0, i)),
        ),
        compiler_params=pltpu.CompilerParams(
            dimension_semantics=("parallel",),
            vmem_limit_bytes=vmem_limit,
        ),
    )(x, w_slab, b_slab)

    return out.reshape(b_pad, n_pad)[:B, :N]   # matches x.view(batch_size, -1)


def masknet_reference(template, source, params):
    """Pure-JAX reference mirroring the PyTorch module (bf16 matmuls, f32 rest)."""
    def dense(x, w, b):
        return jnp.dot(x.astype(jnp.bfloat16), w.astype(jnp.bfloat16),
                       preferred_element_type=jnp.float32) + b

    pn, h3 = params[:N_PN], params[N_PN:]

    def pointnet(x):
        for w, b in pn:
            x = jnp.maximum(dense(x, w, b), 0.0)
        return x

    t_feat = pointnet(template)                      # (B, N, EMB)
    s_feat = pointnet(source)                        # (B, N, EMB)
    pooled = jnp.max(s_feat, axis=1, keepdims=True)  # (B, 1, EMB)
    x = jnp.concatenate([t_feat, jnp.broadcast_to(pooled, t_feat.shape)], axis=-1)
    for i, (w, b) in enumerate(h3):
        x = dense(x, w, b)
        if i < N_H3 - 1:
            x = jnp.maximum(x, 0.0)
    return jax.nn.sigmoid(x)[..., 0]                 # (B, N)


if __name__ == "__main__":
    key = jax.random.PRNGKey(0)
    kt, ks, kp = jax.random.split(key, 3)
    B, N = 2, 16
    template = jax.random.normal(kt, (B, N, 3), jnp.float32)
    source = jax.random.normal(ks, (B, N, 3), jnp.float32)
    params = init_params(kp)

    mask = pointnet_mask(template, source, params)
    jax.block_until_ready(mask)
    assert mask.shape == (B, N)
    assert bool(jnp.all((mask >= 0.0) & (mask <= 1.0)))

    ref = masknet_reference(template, source, params)
    err = float(jnp.max(jnp.abs(mask - ref)))
    assert err < 5e-3, f"max abs error vs reference: {err}"

    print("KERNEL_OK")
</pallas_src>

<mosaic_0001>
module attributes {stable_mosaic.version = 11 : i64} {
  func.func @kernel(%arg0: i32, %arg1: memref<8x512xbf16, #tpu.memory_space<vmem>>, %arg2: memref<11x32x32xbf16, #tpu.memory_space<vmem>>, %arg3: memref<11x32x1xf32, #tpu.memory_space<vmem>>, %arg4: memref<1x256xf32, #tpu.memory_space<vmem>>) attributes {dimension_semantics = [#tpu.dimension_semantics<parallel>], iteration_bounds = array<i64: 1>, scalar_prefetch = 0 : i64, scratch_operands = 0 : i64, tpu.core_type = #tpu.core_type<tc>, window_params = [{transform_indices = @transform_0, window_bounds = array<i64: 8, 512>}, {pipeline_mode = #tpu.pipeline_mode<synchronous>, transform_indices = @transform_1, window_bounds = array<i64: 11, 32, 32>}, {pipeline_mode = #tpu.pipeline_mode<synchronous>, transform_indices = @transform_2, window_bounds = array<i64: 11, 32, 1>}, {transform_indices = @transform_3, window_bounds = array<i64: 1, 256>}]} {
    %c0 = arith.constant 0 : index
    %c0_0 = arith.constant 0 : index
    %0 = vector.load %arg1[%c0, %c0_0] : memref<8x512xbf16, #tpu.memory_space<vmem>>, vector<8x512xbf16>
    %c0_1 = arith.constant 0 : index
    %c0_2 = arith.constant 0 : index
    %c0_3 = arith.constant 0 : index
    %1 = vector.load %arg2[%c0_1, %c0_2, %c0_3] : memref<11x32x32xbf16, #tpu.memory_space<vmem>>, vector<1x8x8xbf16>
    %2 = vector.shape_cast %1 : vector<1x8x8xbf16> to vector<8x8xbf16>
    %cst = arith.constant dense<0.000000e+00> : vector<8x512xf32>
    %3 = tpu.matmul %2, %0, %cst {dimension_numbers = #tpu.dot_dimension_numbers<[1], [0], [0], [1], [0, 0, 1, 1], [], []>} : vector<8x8xbf16>, vector<8x512xbf16>, vector<8x512xf32> -> vector<8x512xf32>
    %c0_4 = arith.constant 0 : index
    %c0_5 = arith.constant 0 : index
    %c0_6 = arith.constant 0 : index
    %4 = vector.load %arg3[%c0_4, %c0_5, %c0_6] : memref<11x32x1xf32, #tpu.memory_space<vmem>>, vector<1x8x1xf32>
    %5 = vector.shape_cast %4 : vector<1x8x1xf32> to vector<8x1xf32>
    %6 = vector.broadcast %5 : vector<8x1xf32> to vector<8x512xf32>
    %7 = arith.addf %3, %6 : vector<8x512xf32>
    %cst_7 = arith.constant 0.000000e+00 : f32
    %8 = vector.broadcast %cst_7 : f32 to vector<8x512xf32>
    %9 = arith.maximumf %7, %8 : vector<8x512xf32>
    %c1 = arith.constant 1 : index
    %c0_8 = arith.constant 0 : index
    %c0_9 = arith.constant 0 : index
    %10 = vector.load %arg2[%c1, %c0_8, %c0_9] : memref<11x32x32xbf16, #tpu.memory_space<vmem>>, vector<1x8x8xbf16>
    %11 = vector.shape_cast %10 : vector<1x8x8xbf16> to vector<8x8xbf16>
    %12 = arith.truncf %9 : vector<8x512xf32> to vector<8x512xbf16>
    %cst_10 = arith.constant dense<0.000000e+00> : vector<8x512xf32>
    %13 = tpu.matmul %11, %12, %cst_10 {dimension_numbers = #tpu.dot_dimension_numbers<[1], [0], [0], [1], [0, 0, 1, 1], [], []>} : vector<8x8xbf16>, vector<8x512xbf16>, vector<8x512xf32> -> vector<8x512xf32>
    %c1_11 = arith.constant 1 : index
    %c0_12 = arith.constant 0 : index
    %c0_13 = arith.constant 0 : index
    %14 = vector.load %arg3[%c1_11, %c0_12, %c0_13] : memref<11x32x1xf32, #tpu.memory_space<vmem>>, vector<1x8x1xf32>
    %15 = vector.shape_cast %14 : vector<1x8x1xf32> to vector<8x1xf32>
    %16 = vector.broadcast %15 : vector<8x1xf32> to vector<8x512xf32>
    %17 = arith.addf %13, %16 : vector<8x512xf32>
    %cst_14 = arith.constant 0.000000e+00 : f32
    %18 = vector.broadcast %cst_14 : f32 to vector<8x512xf32>
    %19 = arith.maximumf %17, %18 : vector<8x512xf32>
    %c2 = arith.constant 2 : index
    %c0_15 = arith.constant 0 : index
    %c0_16 = arith.constant 0 : index
    %20 = vector.load %arg2[%c2, %c0_15, %c0_16] : memref<11x32x32xbf16, #tpu.memory_space<vmem>>, vector<1x8x8xbf16>
    %21 = vector.shape_cast %20 : vector<1x8x8xbf16> to vector<8x8xbf16>
    %22 = arith.truncf %19 : vector<8x512xf32> to vector<8x512xbf16>
    %cst_17 = arith.constant dense<0.000000e+00> : vector<8x512xf32>
    %23 = tpu.matmul %21, %22, %cst_17 {dimension_numbers = #tpu.dot_dimension_numbers<[1], [0], [0], [1], [0, 0, 1, 1], [], []>} : vector<8x8xbf16>, vector<8x512xbf16>, vector<8x512xf32> -> vector<8x512xf32>
    %c2_18 = arith.constant 2 : index
    %c0_19 = arith.constant 0 : index
    %c0_20 = arith.constant 0 : index
    %24 = vector.load %arg3[%c2_18, %c0_19, %c0_20] : memref<11x32x1xf32, #tpu.memory_space<vmem>>, vector<1x8x1xf32>
    %25 = vector.shape_cast %24 : vector<1x8x1xf32> to vector<8x1xf32>
    %26 = vector.broadcast %25 : vector<8x1xf32> to vector<8x512xf32>
    %27 = arith.addf %23, %26 : vector<8x512xf32>
    %cst_21 = arith.constant 0.000000e+00 : f32
    %28 = vector.broadcast %cst_21 : f32 to vector<8x512xf32>
    %29 = arith.maximumf %27, %28 : vector<8x512xf32>
    %c3 = arith.constant 3 : index
    %c0_22 = arith.constant 0 : index
    %c0_23 = arith.constant 0 : index
    %30 = vector.load %arg2[%c3, %c0_22, %c0_23] : memref<11x32x32xbf16, #tpu.memory_space<vmem>>, vector<1x16x8xbf16>
    %31 = vector.shape_cast %30 : vector<1x16x8xbf16> to vector<16x8xbf16>
    %32 = arith.truncf %29 : vector<8x512xf32> to vector<8x512xbf16>
    %cst_24 = arith.constant dense<0.000000e+00> : vector<16x512xf32>
    %33 = tpu.matmul %31, %32, %cst_24 {dimension_numbers = #tpu.dot_dimension_numbers<[1], [0], [0], [1], [0, 0, 1, 1], [], []>} : vector<16x8xbf16>, vector<8x512xbf16>, vector<16x512xf32> -> vector<16x512xf32>
    %c3_25 = arith.constant 3 : index
    %c0_26 = arith.constant 0 : index
    %c0_27 = arith.constant 0 : index
    %34 = vector.load %arg3[%c3_25, %c0_26, %c0_27] : memref<11x32x1xf32, #tpu.memory_space<vmem>>, vector<1x16x1xf32>
    %35 = vector.shape_cast %34 : vector<1x16x1xf32> to vector<16x1xf32>
    %36 = vector.broadcast %35 : vector<16x1xf32> to vector<16x512xf32>
    %37 = arith.addf %33, %36 : vector<16x512xf32>
    %cst_28 = arith.constant 0.000000e+00 : f32
    %38 = vector.broadcast %cst_28 : f32 to vector<16x512xf32>
    %39 = arith.maximumf %37, %38 : vector<16x512xf32>
    %c4 = arith.constant 4 : index
    %c0_29 = arith.constant 0 : index
    %c0_30 = arith.constant 0 : index
    %40 = vector.load %arg2[%c4, %c0_29, %c0_30] : memref<11x32x32xbf16, #tpu.memory_space<vmem>>, vector<1x32x16xbf16>
    %41 = vector.shape_cast %40 : vector<1x32x16xbf16> to vector<32x16xbf16>
    %42 = arith.truncf %39 : vector<16x512xf32> to vector<16x512xbf16>
    %cst_31 = arith.constant dense<0.000000e+00> : vector<32x512xf32>
    %43 = tpu.matmul %41, %42, %cst_31 {dimension_numbers = #tpu.dot_dimension_numbers<[1], [0], [0], [1], [0, 0, 1, 1], [], []>} : vector<32x16xbf16>, vector<16x512xbf16>, vector<32x512xf32> -> vector<32x512xf32>
    %c4_32 = arith.constant 4 : index
    %c0_33 = arith.constant 0 : index
    %c0_34 = arith.constant 0 : index
    %44 = vector.load %arg3[%c4_32, %c0_33, %c0_34] : memref<11x32x1xf32, #tpu.memory_space<vmem>>, vector<1x32x1xf32>
    %45 = vector.shape_cast %44 : vector<1x32x1xf32> to vector<32x1xf32>
    %46 = vector.broadcast %45 : vector<32x1xf32> to vector<32x512xf32>
    %47 = arith.addf %43, %46 : vector<32x512xf32>
    %cst_35 = arith.constant 0.000000e+00 : f32
    %48 = vector.broadcast %cst_35 : f32 to vector<32x512xf32>
    %49 = arith.maximumf %47, %48 : vector<32x512xf32>
    %50 = vector.extract_strided_slice %49 {offsets = [0, 0], sizes = [32, 256], strides = [1, 1]} : vector<32x512xf32> to vector<32x256xf32>
    %51 = vector.extract_strided_slice %49 {offsets = [0, 256], sizes = [32, 256], strides = [1, 1]} : vector<32x512xf32> to vector<32x256xf32>
    %52 = vector.shape_cast %51 : vector<32x256xf32> to vector<32x2x128xf32>
    %53 = tpu.iota {dimensions = array<i32: 2>} : vector<1x1x128xi32>
    %c16_i32 = arith.constant 16 : i32
    %54 = vector.broadcast %c16_i32 : i32 to vector<1x1x128xi32>
    %55 = arith.cmpi slt, %53, %54 : vector<1x1x128xi32>
    %cst_36 = arith.constant -1.000000e+30 : f32
    %56 = vector.shape_cast %55 : vector<1x1x128xi1> to vector<1x1x128xi1>
    %57 = vector.broadcast %56 : vector<1x1x128xi1> to vector<32x2x128xi1>
    %58 = vector.broadcast %cst_36 : f32 to vector<32x2x128xf32>
    %59 = arith.select %57, %52, %58 : vector<32x2x128xi1>, vector<32x2x128xf32>
    %cst_37 = arith.constant dense<0xFF800000> : vector<32x2xf32>
    %60 = vector.multi_reduction <maximumf>, %59, %cst_37 [2] : vector<32x2x128xf32> to vector<32x2xf32>
    %c6 = arith.constant 6 : index
    %c0_38 = arith.constant 0 : index
    %c0_39 = arith.constant 0 : index
    %61 = vector.load %arg2[%c6, %c0_38, %c0_39] : memref<11x32x32xbf16, #tpu.memory_space<vmem>>, vector<1x32x32xbf16>
    %62 = vector.shape_cast %61 : vector<1x32x32xbf16> to vector<32x32xbf16>
    %63 = arith.truncf %60 : vector<32x2xf32> to vector<32x2xbf16>
    %cst_40 = arith.constant dense<0.000000e+00> : vector<32x2xf32>
    %64 = tpu.matmul %62, %63, %cst_40 {dimension_numbers = #tpu.dot_dimension_numbers<[1], [0], [0], [1], [0, 0, 1, 1], [], []>} : vector<32x32xbf16>, vector<32x2xbf16>, vector<32x2xf32> -> vector<32x2xf32>
    %c6_41 = arith.constant 6 : index
    %c0_42 = arith.constant 0 : index
    %c0_43 = arith.constant 0 : index
    %65 = vector.load %arg3[%c6_41, %c0_42, %c0_43] : memref<11x32x1xf32, #tpu.memory_space<vmem>>, vector<1x32x1xf32>
    %66 = vector.shape_cast %65 : vector<1x32x1xf32> to vector<32x1xf32>
    %67 = vector.broadcast %66 : vector<32x1xf32> to vector<32x2xf32>
    %68 = arith.addf %64, %67 : vector<32x2xf32>
    %c5 = arith.constant 5 : index
    %c0_44 = arith.constant 0 : index
    %c0_45 = arith.constant 0 : index
    %69 = vector.load %arg2[%c5, %c0_44, %c0_45] : memref<11x32x32xbf16, #tpu.memory_space<vmem>>, vector<1x32x32xbf16>
    %70 = vector.shape_cast %69 : vector<1x32x32xbf16> to vector<32x32xbf16>
    %71 = arith.truncf %50 : vector<32x256xf32> to vector<32x256xbf16>
    %cst_46 = arith.constant dense<0.000000e+00> : vector<32x256xf32>
    %72 = tpu.matmul %70, %71, %cst_46 {dimension_numbers = #tpu.dot_dimension_numbers<[1], [0], [0], [1], [0, 0, 1, 1], [], []>} : vector<32x32xbf16>, vector<32x256xbf16>, vector<32x256xf32> -> vector<32x256xf32>
    %c5_47 = arith.constant 5 : index
    %c0_48 = arith.constant 0 : index
    %c0_49 = arith.constant 0 : index
    %73 = vector.load %arg3[%c5_47, %c0_48, %c0_49] : memref<11x32x1xf32, #tpu.memory_space<vmem>>, vector<1x32x1xf32>
    %74 = vector.shape_cast %73 : vector<1x32x1xf32> to vector<32x1xf32>
    %75 = vector.broadcast %74 : vector<32x1xf32> to vector<32x256xf32>
    %76 = arith.addf %72, %75 : vector<32x256xf32>
    %77 = vector.shape_cast %76 : vector<32x256xf32> to vector<32x2x128xf32>
    %78 = vector.shape_cast %68 : vector<32x2xf32> to vector<32x2x1xf32>
    %79 = vector.broadcast %78 : vector<32x2x1xf32> to vector<32x2x128xf32>
    %80 = arith.addf %77, %79 : vector<32x2x128xf32>
    %cst_50 = arith.constant 0.000000e+00 : f32
    %81 = vector.broadcast %cst_50 : f32 to vector<32x2x128xf32>
    %82 = arith.maximumf %80, %81 : vector<32x2x128xf32>
    %83 = vector.shape_cast %82 : vector<32x2x128xf32> to vector<32x256xf32>
    %c7 = arith.constant 7 : index
    %c0_51 = arith.constant 0 : index
    %c0_52 = arith.constant 0 : index
    %84 = vector.load %arg2[%c7, %c0_51, %c0_52] : memref<11x32x32xbf16, #tpu.memory_space<vmem>>, vector<1x16x32xbf16>
    %85 = vector.shape_cast %84 : vector<1x16x32xbf16> to vector<16x32xbf16>
    %86 = arith.truncf %83 : vector<32x256xf32> to vector<32x256xbf16>
    %cst_53 = arith.constant dense<0.000000e+00> : vector<16x256xf32>
    %87 = tpu.matmul %85, %86, %cst_53 {dimension_numbers = #tpu.dot_dimension_numbers<[1], [0], [0], [1], [0, 0, 1, 1], [], []>} : vector<16x32xbf16>, vector<32x256xbf16>, vector<16x256xf32> -> vector<16x256xf32>
    %c7_54 = arith.constant 7 : index
    %c0_55 = arith.constant 0 : index
    %c0_56 = arith.constant 0 : index
    %88 = vector.load %arg3[%c7_54, %c0_55, %c0_56] : memref<11x32x1xf32, #tpu.memory_space<vmem>>, vector<1x16x1xf32>
    %89 = vector.shape_cast %88 : vector<1x16x1xf32> to vector<16x1xf32>
    %90 = vector.broadcast %89 : vector<16x1xf32> to vector<16x256xf32>
    %91 = arith.addf %87, %90 : vector<16x256xf32>
    %cst_57 = arith.constant 0.000000e+00 : f32
    %92 = vector.broadcast %cst_57 : f32 to vector<16x256xf32>
    %93 = arith.maximumf %91, %92 : vector<16x256xf32>
    %c8 = arith.constant 8 : index
    %c0_58 = arith.constant 0 : index
    %c0_59 = arith.constant 0 : index
    %94 = vector.load %arg2[%c8, %c0_58, %c0_59] : memref<11x32x32xbf16, #tpu.memory_space<vmem>>, vector<1x16x16xbf16>
    %95 = vector.shape_cast %94 : vector<1x16x16xbf16> to vector<16x16xbf16>
    %96 = arith.truncf %93 : vector<16x256xf32> to vector<16x256xbf16>
    %cst_60 = arith.constant dense<0.000000e+00> : vector<16x256xf32>
    %97 = tpu.matmul %95, %96, %cst_60 {dimension_numbers = #tpu.dot_dimension_numbers<[1], [0], [0], [1], [0, 0, 1, 1], [], []>} : vector<16x16xbf16>, vector<16x256xbf16>, vector<16x256xf32> -> vector<16x256xf32>
    %c8_61 = arith.constant 8 : index
    %c0_62 = arith.constant 0 : index
    %c0_63 = arith.constant 0 : index
    %98 = vector.load %arg3[%c8_61, %c0_62, %c0_63] : memref<11x32x1xf32, #tpu.memory_space<vmem>>, vector<1x16x1xf32>
    %99 = vector.shape_cast %98 : vector<1x16x1xf32> to vector<16x1xf32>
    %100 = vector.broadcast %99 : vector<16x1xf32> to vector<16x256xf32>
    %101 = arith.addf %97, %100 : vector<16x256xf32>
    %cst_64 = arith.constant 0.000000e+00 : f32
    %102 = vector.broadcast %cst_64 : f32 to vector<16x256xf32>
    %103 = arith.maximumf %101, %102 : vector<16x256xf32>
    %c9 = arith.constant 9 : index
    %c0_65 = arith.constant 0 : index
    %c0_66 = arith.constant 0 : index
    %104 = vector.load %arg2[%c9, %c0_65, %c0_66] : memref<11x32x32xbf16, #tpu.memory_space<vmem>>, vector<1x8x16xbf16>
    %105 = vector.shape_cast %104 : vector<1x8x16xbf16> to vector<8x16xbf16>
    %106 = arith.truncf %103 : vector<16x256xf32> to vector<16x256xbf16>
    %cst_67 = arith.constant dense<0.000000e+00> : vector<8x256xf32>
    %107 = tpu.matmul %105, %106, %cst_67 {dimension_numbers = #tpu.dot_dimension_numbers<[1], [0], [0], [1], [0, 0, 1, 1], [], []>} : vector<8x16xbf16>, vector<16x256xbf16>, vector<8x256xf32> -> vector<8x256xf32>
    %c9_68 = arith.constant 9 : index
    %c0_69 = arith.constant 0 : index
    %c0_70 = arith.constant 0 : index
    %108 = vector.load %arg3[%c9_68, %c0_69, %c0_70] : memref<11x32x1xf32, #tpu.memory_space<vmem>>, vector<1x8x1xf32>
    %109 = vector.shape_cast %108 : vector<1x8x1xf32> to vector<8x1xf32>
    %110 = vector.broadcast %109 : vector<8x1xf32> to vector<8x256xf32>
    %111 = arith.addf %107, %110 : vector<8x256xf32>
    %cst_71 = arith.constant 0.000000e+00 : f32
    %112 = vector.broadcast %cst_71 : f32 to vector<8x256xf32>
    %113 = arith.maximumf %111, %112 : vector<8x256xf32>
    %c10 = arith.constant 10 : index
    %c0_72 = arith.constant 0 : index
    %c0_73 = arith.constant 0 : index
    %114 = vector.load %arg2[%c10, %c0_72, %c0_73] : memref<11x32x32xbf16, #tpu.memory_space<vmem>>, vector<1x8x8xbf16>
    %115 = vector.shape_cast %114 : vector<1x8x8xbf16> to vector<8x8xbf16>
    %116 = arith.truncf %113 : vector<8x256xf32> to vector<8x256xbf16>
    %cst_74 = arith.constant dense<0.000000e+00> : vector<8x256xf32>
    %117 = tpu.matmul %115, %116, %cst_74 {dimension_numbers = #tpu.dot_dimension_numbers<[1], [0], [0], [1], [0, 0, 1, 1], [], []>} : vector<8x8xbf16>, vector<8x256xbf16>, vector<8x256xf32> -> vector<8x256xf32>
    %c10_75 = arith.constant 10 : index
    %c0_76 = arith.constant 0 : index
    %c0_77 = arith.constant 0 : index
    %118 = vector.load %arg3[%c10_75, %c0_76, %c0_77] : memref<11x32x1xf32, #tpu.memory_space<vmem>>, vector<1x8x1xf32>
    %119 = vector.shape_cast %118 : vector<1x8x1xf32> to vector<8x1xf32>
    %120 = vector.broadcast %119 : vector<8x1xf32> to vector<8x256xf32>
    %121 = arith.addf %117, %120 : vector<8x256xf32>
    %122 = vector.extract_strided_slice %121 {offsets = [0, 0], sizes = [1, 256], strides = [1, 1]} : vector<8x256xf32> to vector<1x256xf32>
    %123 = arith.negf %122 : vector<1x256xf32>
    %124 = math.exp %123 : vector<1x256xf32>
    %cst_78 = arith.constant 1.000000e+00 : f32
    %125 = vector.broadcast %cst_78 : f32 to vector<1x256xf32>
    %126 = arith.addf %125, %124 : vector<1x256xf32>
    %127 = arith.divf %125, %126 : vector<1x256xf32>
    %c0_79 = arith.constant 0 : index
    %c0_80 = arith.constant 0 : index
    %128 = vector.load %arg4[%c0_79, %c0_80] : memref<1x256xf32, #tpu.memory_space<vmem>>, vector<1x256xf32>
    tpu.vector_store %arg4[%c0_79, %c0_80], %127 {strides = array<i32>} : memref<1x256xf32, #tpu.memory_space<vmem>>, vector<1x256xf32>,
    return
  }
  func.func @transform_0(%arg0: i32) -> (i32, i32) {
    %c0_i32 = arith.constant 0 : i32
    %c0_i32_0 = arith.constant 0 : i32
    return %c0_i32, %arg0 : i32, i32
  }
  func.func @transform_1(%arg0: i32) -> (i32, i32, i32) {
    %c0_i32 = arith.constant 0 : i32
    %c0_i32_0 = arith.constant 0 : i32
    %c0_i32_1 = arith.constant 0 : i32
    %c0_i32_2 = arith.constant 0 : i32
    return %c0_i32, %c0_i32_0, %c0_i32_1 : i32, i32, i32
  }
  func.func @transform_2(%arg0: i32) -> (i32, i32, i32) {
    %c0_i32 = arith.constant 0 : i32
    %c0_i32_0 = arith.constant 0 : i32
    %c0_i32_1 = arith.constant 0 : i32
    %c0_i32_2 = arith.constant 0 : i32
    return %c0_i32, %c0_i32_0, %c0_i32_1 : i32, i32, i32
  }
  func.func @transform_3(%arg0: i32) -> (i32, i32) {
    %c0_i32 = arith.constant 0 : i32
    %c0_i32_0 = arith.constant 0 : i32
    return %c0_i32, %arg0 : i32, i32
  }
}

</mosaic_0001>

<llo_original>
// kernel: tpu_custom_call.1
$region0: #{tpu_custom_call.1}
  #allocation0 [shape = 'u32[]', space=smem, size = 0x4, offset = 0x4, fixed_abs, tag = 'smem constant byte address 0x4 - core index']
  #allocation1 [shape = 'u32[144,128]{1,0:T(1,128)}', space=vmem, size = 0x12000, scoped, tag = 'internal scratch']
  %s0 = inlined_call_operand.hbm [shape: bf16[8,512], index: 0, kind: input, shape index: {}]
  %s1 = inlined_call_operand.hbm [shape: bf16[11,32,32], index: 1, kind: input, shape index: {}]
  %s2 = inlined_call_operand.hbm [shape: f32[11,32,1], index: 2, kind: input, shape index: {}]
  %s3 = inlined_call_operand.hbm [shape: f32[1,256], index: 3, kind: output, shape index: {}]
  %s4 = sld [smem:[#allocation0]]
  $region34: #{tpu_custom_call.1} parent=0
    _
  %s6 = ssub.s32 1, %s4
  %s7 = scalar_select 0, %s6, %s4
  $region1: #{tpu_custom_call.1} parent=0
    #allocation2 [shape = 'u8[8192]{0}', space=vmem, size = 0x2000, scoped, tag = 'input window, operand 0, single buffered']
    #allocation3 [shape = 's32[1]{0}', space=sflag, size = 0x4, scoped, tag = 'scoped memory for tpu_custom_call.1']
    #allocation4 [shape = 's32[1]{0}', space=sflag, size = 0x4, scoped, tag = 'scoped memory for tpu_custom_call.1']
    #allocation5 [shape = 'u8[90112]{0}', space=vmem, size = 0x16000, scoped, tag = 'input window, operand 1, single buffered']
    #allocation6 [shape = 's32[1]{0}', space=sflag, size = 0x4, scoped, tag = 'scoped memory for tpu_custom_call.1']
    #allocation7 [shape = 'u8[180224]{0}', space=vmem, size = 0x2c000, scoped, tag = 'input window, operand 2, single buffered']
    #allocation8 [shape = 'u8[1024]{0}', space=vmem, size = 0x400, scoped, tag = 'output window, operand 0, single buffered']
    %8 = vsyncpa [#allocation3], 0
    %9 = vsyncpa [#allocation6], 0
    %10 = vsyncpa [#allocation4], 0
    // Predicated region
    $region2: #{tpu_custom_call.1} parent=1 // pred_check
      _
    $region3: #{tpu_custom_call.1} parent=1 // pred_check_branch
      %12 = sbr.rel (0) target = $region5
    $region4: #{tpu_custom_call.1} parent=1 // pred_region
      %s14 = ssub.s32 256, 256
      %15 = vsyncadd [#allocation3], %s14
      %s17 = sshll.u32 [#allocation2], 4
      %s18 = int_to_ptr.vmem [resolvable:$true] %s17
      %20 = dma.hbm_to_vmem [thread:$0]  %s0, 256, %s18, [#allocation3]
    $region5: #{tpu_custom_call.1} parent=1 // pred_fallthru
      _
    // Predicated region
    $region6: #{tpu_custom_call.1} parent=1 // pred_check
      _
    $region7: #{tpu_custom_call.1} parent=1 // pred_check_branch
      %22 = sbr.rel (0) target = $region9
    $region8: #{tpu_custom_call.1} parent=1 // pred_region
      %s24 = ssub.s32 2816, 2816
      %25 = vsyncadd [#allocation6], %s24
      %s26 = sshll.u32 [#allocation5], 4
      %s27 = int_to_ptr.vmem [resolvable:$true] %s26
      %32 = dma.hbm_to_vmem [thread:$0]  %s1, 2816, %s27, [#allocation6], 64, 64, 4
    $region9: #{tpu_custom_call.1} parent=1 // pred_fallthru
      _
    // Predicated region
    $region10: #{tpu_custom_call.1} parent=1 // pred_check
      _
    $region11: #{tpu_custom_call.1} parent=1 // pred_check_branch
      %34 = sbr.rel (0) target = $region13
    $region12: #{tpu_custom_call.1} parent=1 // pred_region
      %s36 = ssub.s32 5632, 5632
      %37 = vsyncadd [#allocation6], %s36
      %s38 = sshll.u32 [#allocation7], 4
      %s39 = int_to_ptr.vmem [resolvable:$true] %s38
      %44 = dma.hbm_to_vmem [thread:$0]  %s2, 5632, %s39, [#allocation6], 128, 128, 8
    $region13: #{tpu_custom_call.1} parent=1 // pred_fallthru
      _
    // Predicated region
    $region14: #{tpu_custom_call.1} parent=1 // pred_check
      _
    $region15: #{tpu_custom_call.1} parent=1 // pred_check_branch
      %46 = sbr.rel (0) target = $region17
    $region16: #{tpu_custom_call.1} parent=1 // pred_region
      %47 = dma.done [#allocation3], 256
    $region17: #{tpu_custom_call.1} parent=1 // pred_fallthru
      _
    // Predicated region
    $region18: #{tpu_custom_call.1} parent=1 // pred_check
      _
    $region19: #{tpu_custom_call.1} parent=1 // pred_check_branch
      %49 = sbr.rel (0) target = $region21
    $region20: #{tpu_custom_call.1} parent=1 // pred_region
      %50 = dma.done [#allocation6], 2816
    $region21: #{tpu_custom_call.1} parent=1 // pred_fallthru
      _
    // Predicated region
    $region22: #{tpu_custom_call.1} parent=1 // pred_check
      _
    $region23: #{tpu_custom_call.1} parent=1 // pred_check_branch
      %52 = sbr.rel (0) target = $region25
    $region24: #{tpu_custom_call.1} parent=1 // pred_region
      %53 = dma.done [#allocation6], 5632
    $region25: #{tpu_custom_call.1} parent=1 // pred_fallthru
      _
    %v55 = vld [vmem:[#allocation2] sm:$0xff]
    %v56 = vld [vmem:[#allocation2 + $0x8] sm:$0xff]
    %v57 = vld [vmem:[#allocation5] sm:$0xf]
    %v58 = vld [vmem:[#allocation7] sm:$0xff]
    %60 = vset.pattern.permute.xlu0 0
    %61 = vperm.xlu0 %60, %v58
    %v62 = vpop.permute.xlu0 %61
    %v66 = vunpack.c.l.b16 %v55
    %v67 = vunpack.c.h.b16 %v55
    %v68 = vunpack.c.l.b16 %v56
    %v69 = vunpack.c.h.b16 %v56
    %v70 = vpack.c.b16 %v66, %v66
    %v71 = vpack.c.b16 %v67, %v67
    %v72 = vpack.c.b16 %v68, %v68
    %v73 = vpack.c.b16 %v69, %v69
    %vm74 = vcmask 64512
    %v76 = vsel %vm74, %v57, 0
    %vm78 = vcmask 1043456
    %v80 = vsel %vm78, %v70, 0
    %v83 = vsel %vm78, %v71, 0
    %v86 = vsel %vm78, %v72, 0
    %v89 = vsel %vm78, %v73, 0
    %91 = vmatprep.subr.bf16.mxu0 %v83
    %92 = vmatpush1.bf16.msra.mxu0 %v80
    %93 = vmatprep.subr.bf16.mxu0 0
    %94 = vmatpush1.bf16.msra.mxu0 0
    %95 = vmatprep.subr.bf16.mxu0 0
    %96 = vmatpush1.bf16.msra.mxu0 0
    %97 = vmatprep.subr.bf16.mxu0 0
    %98 = vmatpush1.bf16.msra.mxu0 0
    %99 = vmatprep.subr.bf16.mxu0 0
    %100 = vmatpush1.bf16.msra.mxu0 0
    %101 = vmatprep.subr.bf16.mxu0 0
    %102 = vmatpush1.bf16.msra.mxu0 0
    %103 = vmatprep.subr.bf16.mxu0 0
    %104 = vmatpush1.bf16.msra.mxu0 0
    %105 = vmatprep.subr.bf16.mxu0 0
    %106 = vmatpush1.bf16.msra.mxu0 0
    %107 = vmatprep.subr.bf16.mxu0 0
    %108 = vmatpush1.bf16.msra.mxu0 0
    %109 = vmatprep.subr.bf16.mxu0 0
    %110 = vmatpush1.bf16.msra.mxu0 0
    %111 = vmatprep.subr.bf16.mxu0 0
    %112 = vmatpush1.bf16.msra.mxu0 0
    %113 = vmatprep.subr.bf16.mxu0 0
    %114 = vmatpush1.bf16.msra.mxu0 0
    %115 = vmatprep.subr.bf16.mxu0 0
    %116 = vmatpush1.bf16.msra.mxu0 0
    %117 = vmatprep.subr.bf16.mxu0 0
    %118 = vmatpush1.bf16.msra.mxu0 0
    %119 = vmatprep.subr.bf16.mxu0 0
    %120 = vmatpush1.bf16.msra.mxu0 0
    %121 = vmatprep.subr.bf16.mxu0 0
    %122 = vmatpush1.bf16.msra.mxu0 0
    %123 = vmatprep.mubr.bf16.mxu0 0
    %124 = vmatmul.mubr.bf16.gmra.mrb[0].mxu0 %v76
    %v125 = vpop.f32.mrb[0].mxu0
    %v126 = vadd.f32 %v62, %v125
    %v127 = vpop.f32.mrb[0].mxu0
    %v128 = vadd.f32 %v62, %v127
    %v129 = vpop.f32.mrb[0].mxu0
    %v130 = vpop.f32.mrb[0].mxu0
    %131 = vdwg.mxu0
    %132 = vmatprep.subr.bf16.mxu0 %v89
    %133 = vmatpush1.bf16.msra.mxu0 %v86
    %134 = vmatprep.subr.bf16.mxu0 0
    %135 = vmatpush1.bf16.msra.mxu0 0
    %136 = vmatprep.subr.bf16.mxu0 0
    %137 = vmatpush1.bf16.msra.mxu0 0
    %138 = vmatprep.subr.bf16.mxu0 0
    %139 = vmatpush1.bf16.msra.mxu0 0
    %140 = vmatprep.subr.bf16.mxu0 0
    %141 = vmatpush1.bf16.msra.mxu0 0
    %142 = vmatprep.subr.bf16.mxu0 0
    %143 = vmatpush1.bf16.msra.mxu0 0
    %144 = vmatprep.subr.bf16.mxu0 0
    %145 = vmatpush1.bf16.msra.mxu0 0
    %146 = vmatprep.subr.bf16.mxu0 0
    %147 = vmatpush1.bf16.msra.mxu0 0
    %148 = vmatprep.subr.bf16.mxu0 0
    %149 = vmatpush1.bf16.msra.mxu0 0
    %150 = vmatprep.subr.bf16.mxu0 0
    %151 = vmatpush1.bf16.msra.mxu0 0
    %152 = vmatprep.subr.bf16.mxu0 0
    %153 = vmatpush1.bf16.msra.mxu0 0
    %154 = vmatprep.subr.bf16.mxu0 0
    %155 = vmatpush1.bf16.msra.mxu0 0
    %156 = vmatprep.subr.bf16.mxu0 0
    %157 = vmatpush1.bf16.msra.mxu0 0
    %158 = vmatprep.subr.bf16.mxu0 0
    %159 = vmatpush1.bf16.msra.mxu0 0
    %160 = vmatprep.subr.bf16.mxu0 0
    %161 = vmatpush1.bf16.msra.mxu0 0
    %162 = vmatprep.subr.bf16.mxu0 0
    %163 = vmatpush1.bf16.msra.mxu0 0
    %164 = vmatprep.mubr.bf16.mxu0 0
    %165 = vmatmul.mubr.bf16.gmra.mrb[0].mxu0 %v76
    %v166 = vpop.f32.mrb[0].mxu0
    %v167 = vadd.f32 %v62, %v166
    %v168 = vpop.f32.mrb[0].mxu0
    %v169 = vadd.f32 %v62, %v168
    %v170 = vpop.f32.mrb[0].mxu0
    %v171 = vpop.f32.mrb[0].mxu0
    %172 = vdwg.mxu0
    %v173 = vmax.f32 %v126, 0.0
    %v174 = vmax.f32 %v128, 0.0
    %v175 = vmax.f32 %v167, 0.0
    %v176 = vmax.f32 %v169, 0.0
    %s177 = scalar_lea.vmem [#allocation5], 16
    %v178 = vld [vmem:[%s177] sm:$0xf]
    %v179 = vpack.c.bf16 %v173, %v173
    %v180 = vpack.c.bf16 %v174, %v174
    %v181 = vpack.c.bf16 %v175, %v175
    %v182 = vpack.c.bf16 %v176, %v176
    %s183 = scalar_lea.vmem [#allocation7], 32
    %v184 = vld [vmem:[%s183] sm:$0xff]
    %186 = vset.pattern.permute.xlu0 0
    %187 = vperm.xlu0 %186, %v184
    %v188 = vpop.permute.xlu0 %187
    %v191 = vsel %vm74, %v178, 0
    %v194 = vsel %vm78, %v179, 0
    %v197 = vsel %vm78, %v180, 0
    %v200 = vsel %vm78, %v181, 0
    %v203 = vsel %vm78, %v182, 0
    %205 = vmatprep.subr.bf16.mxu0 %v197
    %206 = vmatpush1.bf16.msra.mxu0 %v194
    %207 = vmatprep.subr.bf16.mxu0 0
    %208 = vmatpush1.bf16.msra.mxu0 0
    %209 = vmatprep.subr.bf16.mxu0 0
    %210 = vmatpush1.bf16.msra.mxu0 0
    %211 = vmatprep.subr.bf16.mxu0 0
    %212 = vmatpush1.bf16.msra.mxu0 0
    %213 = vmatprep.subr.bf16.mxu0 0
    %214 = vmatpush1.bf16.msra.mxu0 0
    %215 = vmatprep.subr.bf16.mxu0 0
    %216 = vmatpush1.bf16.msra.mxu0 0
    %217 = vmatprep.subr.bf16.mxu0 0
    %218 = vmatpush1.bf16.msra.mxu0 0
    %219 = vmatprep.subr.bf16.mxu0 0
    %220 = vmatpush1.bf16.msra.mxu0 0
    %221 = vmatprep.subr.bf16.mxu0 0
    %222 = vmatpush1.bf16.msra.mxu0 0
    %223 = vmatprep.subr.bf16.mxu0 0
    %224 = vmatpush1.bf16.msra.mxu0 0
    %225 = vmatprep.subr.bf16.mxu0 0
    %226 = vmatpush1.bf16.msra.mxu0 0
    %227 = vmatprep.subr.bf16.mxu0 0
    %228 = vmatpush1.bf16.msra.mxu0 0
    %229 = vmatprep.subr.bf16.mxu0 0
    %230 = vmatpush1.bf16.msra.mxu0 0
    %231 = vmatprep.subr.bf16.mxu0 0
    %232 = vmatpush1.bf16.msra.mxu0 0
    %233 = vmatprep.subr.bf16.mxu0 0
    %234 = vmatpush1.bf16.msra.mxu0 0
    %235 = vmatprep.subr.bf16.mxu0 0
    %236 = vmatpush1.bf16.msra.mxu0 0
    %237 = vmatprep.mubr.bf16.mxu0 0
    %238 = vmatmul.mubr.bf16.gmra.mrb[0].mxu0 %v191
    %v239 = vpop.f32.mrb[0].mxu0
    %v240 = vadd.f32 %v188, %v239
    %v241 = vpop.f32.mrb[0].mxu0
    %v242 = vadd.f32 %v188, %v241
    %v243 = vpop.f32.mrb[0].mxu0
    %v244 = vpop.f32.mrb[0].mxu0
    %245 = vdwg.mxu0
    %246 = vmatprep.subr.bf16.mxu0 %v203
    %247 = vmatpush1.bf16.msra.mxu0 %v200
    %248 = vmatprep.subr.bf16.mxu0 0
    %249 = vmatpush1.bf16.msra.mxu0 0
    %250 = vmatprep.subr.bf16.mxu0 0
    %251 = vmatpush1.bf16.msra.mxu0 0
    %252 = vmatprep.subr.bf16.mxu0 0
    %253 = vmatpush1.bf16.msra.mxu0 0
    %254 = vmatprep.subr.bf16.mxu0 0
    %255 = vmatpush1.bf16.msra.mxu0 0
    %256 = vmatprep.subr.bf16.mxu0 0
    %257 = vmatpush1.bf16.msra.mxu0 0
    %258 = vmatprep.subr.bf16.mxu0 0
    %259 = vmatpush1.bf16.msra.mxu0 0
    %260 = vmatprep.subr.bf16.mxu0 0
    %261 = vmatpush1.bf16.msra.mxu0 0
    %262 = vmatprep.subr.bf16.mxu0 0
    %263 = vmatpush1.bf16.msra.mxu0 0
    %264 = vmatprep.subr.bf16.mxu0 0
    %265 = vmatpush1.bf16.msra.mxu0 0
    %266 = vmatprep.subr.bf16.mxu0 0
    %267 = vmatpush1.bf16.msra.mxu0 0
    %268 = vmatprep.subr.bf16.mxu0 0
    %269 = vmatpush1.bf16.msra.mxu0 0
    %270 = vmatprep.subr.bf16.mxu0 0
    %271 = vmatpush1.bf16.msra.mxu0 0
    %272 = vmatprep.subr.bf16.mxu0 0
    %273 = vmatpush1.bf16.msra.mxu0 0
    %274 = vmatprep.subr.bf16.mxu0 0
    %275 = vmatpush1.bf16.msra.mxu0 0
    %276 = vmatprep.subr.bf16.mxu0 0
    %277 = vmatpush1.bf16.msra.mxu0 0
    %278 = vmatprep.mubr.bf16.mxu0 0
    %279 = vmatmul.mubr.bf16.gmra.mrb[0].mxu0 %v191
    %v280 = vpop.f32.mrb[0].mxu0
    %v281 = vadd.f32 %v188, %v280
    %v282 = vpop.f32.mrb[0].mxu0
    %v283 = vadd.f32 %v188, %v282
    %v284 = vpop.f32.mrb[0].mxu0
    %v285 = vpop.f32.mrb[0].mxu0
    %286 = vdwg.mxu0
    %v287 = vmax.f32 %v240, 0.0
    %v288 = vmax.f32 %v242, 0.0
    %v289 = vmax.f32 %v281, 0.0
    %v290 = vmax.f32 %v283, 0.0
    %s291 = scalar_lea.vmem [#allocation5], 32
    %v292 = vld [vmem:[%s291] sm:$0xf]
    %v293 = vpack.c.bf16 %v287, %v287
    %v294 = vpack.c.bf16 %v288, %v288
    %v295 = vpack.c.bf16 %v289, %v289
    %v296 = vpack.c.bf16 %v290, %v290
    %s297 = scalar_lea.vmem [#allocation7], 64
    %v298 = vld [vmem:[%s297] sm:$0xff]
    %300 = vset.pattern.permute.xlu0 0
    %301 = vperm.xlu0 %300, %v298
    %v302 = vpop.permute.xlu0 %301
    %v305 = vsel %vm74, %v292, 0
    %v308 = vsel %vm78, %v293, 0
    %v311 = vsel %vm78, %v294, 0
    %v314 = vsel %vm78, %v295, 0
    %v317 = vsel %vm78, %v296, 0
    %319 = vmatprep.subr.bf16.mxu0 %v311
    %320 = vmatpush1.bf16.msra.mxu0 %v308
    %321 = vmatprep.subr.bf16.mxu0 0
    %322 = vmatpush1.bf16.msra.mxu0 0
    %323 = vmatprep.subr.bf16.mxu0 0
    %324 = vmatpush1.bf16.msra.mxu0 0
    %325 = vmatprep.subr.bf16.mxu0 0
    %326 = vmatpush1.bf16.msra.mxu0 0
    %327 = vmatprep.subr.bf16.mxu0 0
    %328 = vmatpush1.bf16.msra.mxu0 0
    %329 = vmatprep.subr.bf16.mxu0 0
    %330 = vmatpush1.bf16.msra.mxu0 0
    %331 = vmatprep.subr.bf16.mxu0 0
    %332 = vmatpush1.bf16.msra.mxu0 0
    %333 = vmatprep.subr.bf16.mxu0 0
    %334 = vmatpush1.bf16.msra.mxu0 0
    %335 = vmatprep.subr.bf16.mxu0 0
    %336 = vmatpush1.bf16.msra.mxu0 0
    %337 = vmatprep.subr.bf16.mxu0 0
    %338 = vmatpush1.bf16.msra.mxu0 0
    %339 = vmatprep.subr.bf16.mxu0 0
    %340 = vmatpush1.bf16.msra.mxu0 0
    %341 = vmatprep.subr.bf16.mxu0 0
    %342 = vmatpush1.bf16.msra.mxu0 0
    %343 = vmatprep.subr.bf16.mxu0 0
    %344 = vmatpush1.bf16.msra.mxu0 0
    %345 = vmatprep.subr.bf16.mxu0 0
    %346 = vmatpush1.bf16.msra.mxu0 0
    %347 = vmatprep.subr.bf16.mxu0 0
    %348 = vmatpush1.bf16.msra.mxu0 0
    %349 = vmatprep.subr.bf16.mxu0 0
    %350 = vmatpush1.bf16.msra.mxu0 0
    %351 = vmatprep.mubr.bf16.mxu0 0
    %352 = vmatmul.mubr.bf16.gmra.mrb[0].mxu0 %v305
    %v353 = vpop.f32.mrb[0].mxu0
    %v354 = vadd.f32 %v302, %v353
    %v355 = vpop.f32.mrb[0].mxu0
    %v356 = vadd.f32 %v302, %v355
    %v357 = vpop.f32.mrb[0].mxu0
    %v358 = vpop.f32.mrb[0].mxu0
    %359 = vdwg.mxu0
    %360 = vmatprep.subr.bf16.mxu0 %v317
    %361 = vmatpush1.bf16.msra.mxu0 %v314
    %362 = vmatprep.subr.bf16.mxu0 0
    %363 = vmatpush1.bf16.msra.mxu0 0
    %364 = vmatprep.subr.bf16.mxu0 0
    %365 = vmatpush1.bf16.msra.mxu0 0
    %366 = vmatprep.subr.bf16.mxu0 0
    %367 = vmatpush1.bf16.msra.mxu0 0
    %368 = vmatprep.subr.bf16.mxu0 0
    %369 = vmatpush1.bf16.msra.mxu0 0
    %370 = vmatprep.subr.bf16.mxu0 0
    %371 = vmatpush1.bf16.msra.mxu0 0
    %372 = vmatprep.subr.bf16.mxu0 0
    %373 = vmatpush1.bf16.msra.mxu0 0
    %374 = vmatprep.subr.bf16.mxu0 0
    %375 = vmatpush1.bf16.msra.mxu0 0
    %376 = vmatprep.subr.bf16.mxu0 0
    %377 = vmatpush1.bf16.msra.mxu0 0
    %378 = vmatprep.subr.bf16.mxu0 0
    %379 = vmatpush1.bf16.msra.mxu0 0
    %380 = vmatprep.subr.bf16.mxu0 0
    %381 = vmatpush1.bf16.msra.mxu0 0
    %382 = vmatprep.subr.bf16.mxu0 0
    %383 = vmatpush1.bf16.msra.mxu0 0
    %384 = vmatprep.subr.bf16.mxu0 0
    %385 = vmatpush1.bf16.msra.mxu0 0
    %386 = vmatprep.subr.bf16.mxu0 0
    %387 = vmatpush1.bf16.msra.mxu0 0
    %388 = vmatprep.subr.bf16.mxu0 0
    %389 = vmatpush1.bf16.msra.mxu0 0
    %390 = vmatprep.subr.bf16.mxu0 0
    %391 = vmatpush1.bf16.msra.mxu0 0
    %392 = vmatprep.mubr.bf16.mxu0 0
    %393 = vmatmul.mubr.bf16.gmra.mrb[0].mxu0 %v305
    %v394 = vpop.f32.mrb[0].mxu0
    %v395 = vadd.f32 %v302, %v394
    %v396 = vpop.f32.mrb[0].mxu0
    %v397 = vadd.f32 %v302, %v396
    %v398 = vpop.f32.mrb[0].mxu0
    %v399 = vpop.f32.mrb[0].mxu0
    %400 = vdwg.mxu0
    %v401 = vmax.f32 %v354, 0.0
    %v402 = vmax.f32 %v356, 0.0
    %v403 = vmax.f32 %v395, 0.0
    %v404 = vmax.f32 %v397, 0.0
    %s405 = scalar_lea.vmem [#allocation5], 48
    %v406 = vld [vmem:[%s405] sm:$0xf]
    %v407 = vld [vmem:[%s405 + $0x4] sm:$0xf]
    %v408 = vpack.c.bf16 %v401, %v401
    %v409 = vpack.c.bf16 %v402, %v402
    %v410 = vpack.c.bf16 %v403, %v403
    %v411 = vpack.c.bf16 %v404, %v404
    %s412 = scalar_lea.vmem [#allocation7], 96
    %v413 = vld [vmem:[%s412] sm:$0xff]
    %v414 = vld [vmem:[%s412 + $0x8] sm:$0xff]
    %416 = vset.pattern.permute.xlu0 0
    %417 = vperm.xlu0 %416, %v413
    %v418 = vpop.permute.xlu0 %417
    %421 = vset.pattern.permute.xlu0 0
    %422 = vperm.xlu0 %421, %v414
    %v423 = vpop.permute.xlu0 %422
    %v427 = vunpack.c.l.b16 %v406
    %v428 = vunpack.c.l.b16 %v407
    %v429 = vpack.c.b16 %v428, %v427
    %v431 = vsel %vm74, %v429, 0
    %v434 = vsel %vm78, %v408, 0
    %v437 = vsel %vm78, %v409, 0
    %v440 = vsel %vm78, %v410, 0
    %v443 = vsel %vm78, %v411, 0
    %445 = vmatprep.subr.bf16.mxu0 %v437
    %446 = vmatpush1.bf16.msra.mxu0 %v434
    %447 = vmatprep.subr.bf16.mxu0 0
    %448 = vmatpush1.bf16.msra.mxu0 0
    %449 = vmatprep.subr.bf16.mxu0 0
    %450 = vmatpush1.bf16.msra.mxu0 0
    %451 = vmatprep.subr.bf16.mxu0 0
    %452 = vmatpush1.bf16.msra.mxu0 0
    %453 = vmatprep.subr.bf16.mxu0 0
    %454 = vmatpush1.bf16.msra.mxu0 0
    %455 = vmatprep.subr.bf16.mxu0 0
    %456 = vmatpush1.bf16.msra.mxu0 0
    %457 = vmatprep.subr.bf16.mxu0 0
    %458 = vmatpush1.bf16.msra.mxu0 0
    %459 = vmatprep.subr.bf16.mxu0 0
    %460 = vmatpush1.bf16.msra.mxu0 0
    %461 = vmatprep.subr.bf16.mxu0 0
    %462 = vmatpush1.bf16.msra.mxu0 0
    %463 = vmatprep.subr.bf16.mxu0 0
    %464 = vmatpush1.bf16.msra.mxu0 0
    %465 = vmatprep.subr.bf16.mxu0 0
    %466 = vmatpush1.bf16.msra.mxu0 0
    %467 = vmatprep.subr.bf16.mxu0 0
    %468 = vmatpush1.bf16.msra.mxu0 0
    %469 = vmatprep.subr.bf16.mxu0 0
    %470 = vmatpush1.bf16.msra.mxu0 0
    %471 = vmatprep.subr.bf16.mxu0 0
    %472 = vmatpush1.bf16.msra.mxu0 0
    %473 = vmatprep.subr.bf16.mxu0 0
    %474 = vmatpush1.bf16.msra.mxu0 0
    %475 = vmatprep.subr.bf16.mxu0 0
    %476 = vmatpush1.bf16.msra.mxu0 0
    %477 = vmatprep.mubr.bf16.mxu0 0
    %478 = vmatmul.mubr.bf16.gmra.mrb[0].mxu0 %v431
    %v479 = vpop.f32.mrb[0].mxu0
    %v480 = vadd.f32 %v418, %v479
    %v481 = vpop.f32.mrb[0].mxu0
    %v482 = vadd.f32 %v418, %v481
    %v483 = vpop.f32.mrb[0].mxu0
    %v484 = vadd.f32 %v423, %v483
    %v485 = vpop.f32.mrb[0].mxu0
    %v486 = vadd.f32 %v423, %v485
    %487 = vdwg.mxu0
    %488 = vmatprep.subr.bf16.mxu0 %v443
    %489 = vmatpush1.bf16.msra.mxu0 %v440
    %490 = vmatprep.subr.bf16.mxu0 0
    %491 = vmatpush1.bf16.msra.mxu0 0
    %492 = vmatprep.subr.bf16.mxu0 0
    %493 = vmatpush1.bf16.msra.mxu0 0
    %494 = vmatprep.subr.bf16.mxu0 0
    %495 = vmatpush1.bf16.msra.mxu0 0
    %496 = vmatprep.subr.bf16.mxu0 0
    %497 = vmatpush1.bf16.msra.mxu0 0
    %498 = vmatprep.subr.bf16.mxu0 0
    %499 = vmatpush1.bf16.msra.mxu0 0
    %500 = vmatprep.subr.bf16.mxu0 0
    %501 = vmatpush1.bf16.msra.mxu0 0
    %502 = vmatprep.subr.bf16.mxu0 0
    %503 = vmatpush1.bf16.msra.mxu0 0
    %504 = vmatprep.subr.bf16.mxu0 0
    %505 = vmatpush1.bf16.msra.mxu0 0
    %506 = vmatprep.subr.bf16.mxu0 0
    %507 = vmatpush1.bf16.msra.mxu0 0
    %508 = vmatprep.subr.bf16.mxu0 0
    %509 = vmatpush1.bf16.msra.mxu0 0
    %510 = vmatprep.subr.bf16.mxu0 0
    %511 = vmatpush1.bf16.msra.mxu0 0
    %512 = vmatprep.subr.bf16.mxu0 0
    %513 = vmatpush1.bf16.msra.mxu0 0
    %514 = vmatprep.subr.bf16.mxu0 0
    %515 = vmatpush1.bf16.msra.mxu0 0
    %516 = vmatprep.subr.bf16.mxu0 0
    %517 = vmatpush1.bf16.msra.mxu0 0
    %518 = vmatprep.subr.bf16.mxu0 0
    %519 = vmatpush1.bf16.msra.mxu0 0
    %520 = vmatprep.mubr.bf16.mxu0 0
    %521 = vmatmul.mubr.bf16.gmra.mrb[0].mxu0 %v431
    %v522 = vpop.f32.mrb[0].mxu0
    %v523 = vadd.f32 %v418, %v522
    %v524 = vpop.f32.mrb[0].mxu0
    %v525 = vadd.f32 %v418, %v524
    %v526 = vpop.f32.mrb[0].mxu0
    %v527 = vadd.f32 %v423, %v526
    %v528 = vpop.f32.mrb[0].mxu0
    %v529 = vadd.f32 %v423, %v528
    %530 = vdwg.mxu0
    %v531 = vmax.f32 %v480, 0.0
    %v532 = vmax.f32 %v482, 0.0
    %v533 = vmax.f32 %v523, 0.0
    %v534 = vmax.f32 %v525, 0.0
    %v535 = vmax.f32 %v484, 0.0
    %v536 = vmax.f32 %v486, 0.0
    %v537 = vmax.f32 %v527, 0.0
    %v538 = vmax.f32 %v529, 0.0
    %s539 = scalar_lea.vmem [#allocation5], 64
    %v540 = vld [vmem:[%s539] sm:$0xf]
    %v541 = vld [vmem:[%s539 + $0x4] sm:$0xf]
    %v542 = vld [vmem:[%s539 + $0x8] sm:$0xf]
    %v543 = vld [vmem:[%s539 + $0xc] sm:$0xf]
    %v544 = vpack.c.bf16 %v535, %v531
    %v545 = vpack.c.bf16 %v536, %v532
    %v546 = vpack.c.bf16 %v537, %v533
    %v547 = vpack.c.bf16 %v538, %v534
    %s548 = scalar_lea.vmem [#allocation7], 128
    %v549 = vld [vmem:[%s548] sm:$0xff]
    %v550 = vld [vmem:[%s548 + $0x8] sm:$0xff]
    %v551 = vld [vmem:[%s548 + $0x10] sm:$0xff]
    %v552 = vld [vmem:[%s548 + $0x18] sm:$0xff]
    %554 = vset.pattern.permute.xlu0 0
    %555 = vperm.xlu0 %554, %v549
    %v556 = vpop.permute.xlu0 %555
    %559 = vset.pattern.permute.xlu0 0
    %560 = vperm.xlu0 %559, %v550
    %v561 = vpop.permute.xlu0 %560
    %564 = vset.pattern.permute.xlu0 0
    %565 = vperm.xlu0 %564, %v551
    %v566 = vpop.permute.xlu0 %565
    %569 = vset.pattern.permute.xlu0 0
    %570 = vperm.xlu0 %569, %v552
    %v571 = vpop.permute.xlu0 %570
    %v577 = vunpack.c.l.b16 %v540
    %v578 = vunpack.c.l.b16 %v541
    %v579 = vunpack.c.l.b16 %v542
    %v580 = vunpack.c.l.b16 %v543
    %v581 = vpack.c.b16 %v578, %v577
    %v582 = vpack.c.b16 %v580, %v579
    %vm583 = vcmask 130048
    %v585 = vsel %vm583, %v581, 0
    %v588 = vsel %vm583, %v582, 0
    %590 = vmatprep.subr.bf16.mxu0 %v545
    %591 = vmatpush1.bf16.msra.mxu0 %v544
    %592 = vmatprep.subr.bf16.mxu0 0
    %593 = vmatpush1.bf16.msra.mxu0 0
    %594 = vmatprep.subr.bf16.mxu0 0
    %595 = vmatpush1.bf16.msra.mxu0 0
    %596 = vmatprep.subr.bf16.mxu0 0
    %597 = vmatpush1.bf16.msra.mxu0 0
    %598 = vmatprep.subr.bf16.mxu0 0
    %599 = vmatpush1.bf16.msra.mxu0 0
    %600 = vmatprep.subr.bf16.mxu0 0
    %601 = vmatpush1.bf16.msra.mxu0 0
    %602 = vmatprep.subr.bf16.mxu0 0
    %603 = vmatpush1.bf16.msra.mxu0 0
    %604 = vmatprep.subr.bf16.mxu0 0
    %605 = vmatpush1.bf16.msra.mxu0 0
    %606 = vmatprep.subr.bf16.mxu0 0
    %607 = vmatpush1.bf16.msra.mxu0 0
    %608 = vmatprep.subr.bf16.mxu0 0
    %609 = vmatpush1.bf16.msra.mxu0 0
    %610 = vmatprep.subr.bf16.mxu0 0
    %611 = vmatpush1.bf16.msra.mxu0 0
    %612 = vmatprep.subr.bf16.mxu0 0
    %613 = vmatpush1.bf16.msra.mxu0 0
    %614 = vmatprep.subr.bf16.mxu0 0
    %615 = vmatpush1.bf16.msra.mxu0 0
    %616 = vmatprep.subr.bf16.mxu0 0
    %617 = vmatpush1.bf16.msra.mxu0 0
    %618 = vmatprep.subr.bf16.mxu0 0
    %619 = vmatpush1.bf16.msra.mxu0 0
    %620 = vmatprep.subr.bf16.mxu0 0
    %621 = vmatpush1.bf16.msra.mxu0 0
    %622 = vmatprep.mubr.bf16.mxu0 0
    %623 = vmatmul.mubr.bf16.gmra.mrb[0].mxu0 %v585
    %v624 = vpop.f32.mrb[0].mxu0
    %v625 = vadd.f32 %v556, %v624
    %v626 = vpop.f32.mrb[0].mxu0
    %v627 = vadd.f32 %v556, %v626
    %v628 = vpop.f32.mrb[0].mxu0
    %v629 = vadd.f32 %v561, %v628
    %v630 = vpop.f32.mrb[0].mxu0
    %v631 = vadd.f32 %v561, %v630
    %632 = vmatprep.mubr.bf16.mxu0 0
    %633 = vmatmul.mubr.bf16.gmra.mrb[0].mxu0 %v588
    %v634 = vpop.f32.mrb[0].mxu0
    %v635 = vadd.f32 %v566, %v634
    %v636 = vpop.f32.mrb[0].mxu0
    %v637 = vadd.f32 %v566, %v636
    %v638 = vpop.f32.mrb[0].mxu0
    %v639 = vadd.f32 %v571, %v638
    %v640 = vpop.f32.mrb[0].mxu0
    %v641 = vadd.f32 %v571, %v640
    %642 = vdwg.mxu0
    %643 = vmatprep.subr.bf16.mxu0 %v547
    %644 = vmatpush1.bf16.msra.mxu0 %v546
    %645 = vmatprep.subr.bf16.mxu0 0
    %646 = vmatpush1.bf16.msra.mxu0 0
    %647 = vmatprep.subr.bf16.mxu0 0
    %648 = vmatpush1.bf16.msra.mxu0 0
    %649 = vmatprep.subr.bf16.mxu0 0
    %650 = vmatpush1.bf16.msra.mxu0 0
    %651 = vmatprep.subr.bf16.mxu0 0
    %652 = vmatpush1.bf16.msra.mxu0 0
    %653 = vmatprep.subr.bf16.mxu0 0
    %654 = vmatpush1.bf16.msra.mxu0 0
    %655 = vmatprep.subr.bf16.mxu0 0
    %656 = vmatpush1.bf16.msra.mxu0 0
    %657 = vmatprep.subr.bf16.mxu0 0
    %658 = vmatpush1.bf16.msra.mxu0 0
    %659 = vmatprep.subr.bf16.mxu0 0
    %660 = vmatpush1.bf16.msra.mxu0 0
    %661 = vmatprep.subr.bf16.mxu0 0
    %662 = vmatpush1.bf16.msra.mxu0 0
    %663 = vmatprep.subr.bf16.mxu0 0
    %664 = vmatpush1.bf16.msra.mxu0 0
    %665 = vmatprep.subr.bf16.mxu0 0
    %666 = vmatpush1.bf16.msra.mxu0 0
    %667 = vmatprep.subr.bf16.mxu0 0
    %668 = vmatpush1.bf16.msra.mxu0 0
    %669 = vmatprep.subr.bf16.mxu0 0
    %670 = vmatpush1.bf16.msra.mxu0 0
    %671 = vmatprep.subr.bf16.mxu0 0
    %672 = vmatpush1.bf16.msra.mxu0 0
    %673 = vmatprep.subr.bf16.mxu0 0
    %674 = vmatpush1.bf16.msra.mxu0 0
    %675 = vmatprep.mubr.bf16.mxu0 0
    %676 = vmatmul.mubr.bf16.gmra.mrb[0].mxu0 %v585
    %v677 = vpop.f32.mrb[0].mxu0
    %v678 = vadd.f32 %v556, %v677
    %v679 = vpop.f32.mrb[0].mxu0
    %v680 = vadd.f32 %v556, %v679
    %v681 = vpop.f32.mrb[0].mxu0
    %v682 = vadd.f32 %v561, %v681
    %v683 = vpop.f32.mrb[0].mxu0
    %v684 = vadd.f32 %v561, %v683
    %685 = vmatprep.mubr.bf16.mxu0 0
    %686 = vmatmul.mubr.bf16.gmra.mrb[0].mxu0 %v588
    %v687 = vpop.f32.mrb[0].mxu0
    %v688 = vadd.f32 %v566, %v687
    %v689 = vpop.f32.mrb[0].mxu0
    %v690 = vadd.f32 %v566, %v689
    %v691 = vpop.f32.mrb[0].mxu0
    %v692 = vadd.f32 %v571, %v691
    %v693 = vpop.f32.mrb[0].mxu0
    %v694 = vadd.f32 %v571, %v693
    %695 = vdwg.mxu0
    %v696 = vmax.f32 %v625, 0.0
    %v697 = vmax.f32 %v627, 0.0
    %v698 = vmax.f32 %v678, 0.0
    %v699 = vmax.f32 %v680, 0.0
    %v700 = vmax.f32 %v629, 0.0
    %v701 = vmax.f32 %v631, 0.0
    %v702 = vmax.f32 %v682, 0.0
    %v703 = vmax.f32 %v684, 0.0
    %v704 = vmax.f32 %v635, 0.0
    %v705 = vmax.f32 %v637, 0.0
    %v706 = vmax.f32 %v688, 0.0
    %v707 = vmax.f32 %v690, 0.0
    %v708 = vmax.f32 %v639, 0.0
    %v709 = vmax.f32 %v641, 0.0
    %v710 = vmax.f32 %v692, 0.0
    %v711 = vmax.f32 %v694, 0.0
    %v712 = vcombine.high %v698, 0.0
    %v714 = vunpack.c.l.s4 1983009808
    %v715 = vunpack.c.0.s8 %v714
    %v716 = vlaneseq
    %v717 = vshrl.u32 %v716, 7
    %v718 = vsub.s32 %v715, %v717
    %v719 = vrot.slane %v698, %v718
    %v721 = vunpack.c.l.s4 1983009808
    %v722 = vunpack.c.0.s8 %v721
    %v723 = vlaneseq
    %v724 = vshrl.u32 %v723, 7
    %v725 = vsub.s32 %v722, %v724
    %v726 = vrot.slane %v712, %v725
    %v727 = vcombine.high %v699, 0.0
    %v729 = vunpack.c.l.s4 1983009808
    %v730 = vunpack.c.0.s8 %v729
    %v731 = vlaneseq
    %v732 = vshrl.u32 %v731, 7
    %v733 = vsub.s32 %v730, %v732
    %v734 = vrot.slane %v699, %v733
    %v736 = vunpack.c.l.s4 1983009808
    %v737 = vunpack.c.0.s8 %v736
    %v738 = vlaneseq
    %v739 = vshrl.u32 %v738, 7
    %v740 = vsub.s32 %v737, %v739
    %v741 = vrot.slane %v727, %v740
    %v742 = vcombine.low %v719, %v734
    %v743 = vcombine.high %v719, %v734
    %v745 = vunpack.c.l.s4 1934713408
    %v746 = vunpack.c.0.s8 %v745
    %v747 = vlaneseq
    %v748 = vshrl.u32 %v747, 7
    %v749 = vsub.s32 %v746, %v748
    %v750 = vrot.slane %v742, %v749
    %v752 = vunpack.c.l.s4 1934713408
    %v753 = vunpack.c.0.s8 %v752
    %v754 = vlaneseq
    %v755 = vshrl.u32 %v754, 7
    %v756 = vsub.s32 %v753, %v755
    %v757 = vrot.slane %v743, %v756
    %v758 = vcombine.low %v726, %v741
    %v759 = vcombine.high %v726, %v741
    %v761 = vunpack.c.l.s4 1934713408
    %v762 = vunpack.c.0.s8 %v761
    %v763 = vlaneseq
    %v764 = vshrl.u32 %v763, 7
    %v765 = vsub.s32 %v762, %v764
    %v766 = vrot.slane %v758, %v765
    %v768 = vunpack.c.l.s4 1934713408
    %v769 = vunpack.c.0.s8 %v768
    %v770 = vlaneseq
    %v771 = vshrl.u32 %v770, 7
    %v772 = vsub.s32 %v769, %v771
    %v773 = vrot.slane %v759, %v772
    %v774 = vcombine.high %v750, 0.0
    %v775 = vcombine.high %v757, 0.0
    %v776 = vcombine.high %v766, 0.0
    %v777 = vcombine.high %v773, 0.0
    %v778 = vcombine.high %v702, 0.0
    %v780 = vunpack.c.l.s4 1983009808
    %v781 = vunpack.c.0.s8 %v780
    %v782 = vlaneseq
    %v783 = vshrl.u32 %v782, 7
    %v784 = vsub.s32 %v781, %v783
    %v785 = vrot.slane %v702, %v784
    %v787 = vunpack.c.l.s4 1983009808
    %v788 = vunpack.c.0.s8 %v787
    %v789 = vlaneseq
    %v790 = vshrl.u32 %v789, 7
    %v791 = vsub.s32 %v788, %v790
    %v792 = vrot.slane %v778, %v791
    %v793 = vcombine.high %v703, 0.0
    %v795 = vunpack.c.l.s4 1983009808
    %v796 = vunpack.c.0.s8 %v795
    %v797 = vlaneseq
    %v798 = vshrl.u32 %v797, 7
    %v799 = vsub.s32 %v796, %v798
    %v800 = vrot.slane %v703, %v799
    %v802 = vunpack.c.l.s4 1983009808
    %v803 = vunpack.c.0.s8 %v802
    %v804 = vlaneseq
    %v805 = vshrl.u32 %v804, 7
    %v806 = vsub.s32 %v803, %v805
    %v807 = vrot.slane %v793, %v806
    %v808 = vcombine.low %v785, %v800
    %v809 = vcombine.high %v785, %v800
    %v811 = vunpack.c.l.s4 1934713408
    %v812 = vunpack.c.0.s8 %v811
    %v813 = vlaneseq
    %v814 = vshrl.u32 %v813, 7
    %v815 = vsub.s32 %v812, %v814
    %v816 = vrot.slane %v808, %v815
    %v818 = vunpack.c.l.s4 1934713408
    %v819 = vunpack.c.0.s8 %v818
    %v820 = vlaneseq
    %v821 = vshrl.u32 %v820, 7
    %v822 = vsub.s32 %v819, %v821
    %v823 = vrot.slane %v809, %v822
    %v824 = vcombine.low %v792, %v807
    %v825 = vcombine.high %v792, %v807
    %v827 = vunpack.c.l.s4 1934713408
    %v828 = vunpack.c.0.s8 %v827
    %v829 = vlaneseq
    %v830 = vshrl.u32 %v829, 7
    %v831 = vsub.s32 %v828, %v830
    %v832 = vrot.slane %v824, %v831
    %v834 = vunpack.c.l.s4 1934713408
    %v835 = vunpack.c.0.s8 %v834
    %v836 = vlaneseq
    %v837 = vshrl.u32 %v836, 7
    %v838 = vsub.s32 %v835, %v837
    %v839 = vrot.slane %v825, %v838
    %v840 = vcombine.high %v816, 0.0
    %v841 = vcombine.high %v823, 0.0
    %v842 = vcombine.high %v832, 0.0
    %v843 = vcombine.high %v839, 0.0
    %v844 = vcombine.high %v706, 0.0
    %v846 = vunpack.c.l.s4 1983009808
    %v847 = vunpack.c.0.s8 %v846
    %v848 = vlaneseq
    %v849 = vshrl.u32 %v848, 7
    %v850 = vsub.s32 %v847, %v849
    %v851 = vrot.slane %v706, %v850
    %v853 = vunpack.c.l.s4 1983009808
    %v854 = vunpack.c.0.s8 %v853
    %v855 = vlaneseq
    %v856 = vshrl.u32 %v855, 7
    %v857 = vsub.s32 %v854, %v856
    %v858 = vrot.slane %v844, %v857
    %v859 = vcombine.high %v707, 0.0
    %v861 = vunpack.c.l.s4 1983009808
    %v862 = vunpack.c.0.s8 %v861
    %v863 = vlaneseq
    %v864 = vshrl.u32 %v863, 7
    %v865 = vsub.s32 %v862, %v864
    %v866 = vrot.slane %v707, %v865
    %v868 = vunpack.c.l.s4 1983009808
    %v869 = vunpack.c.0.s8 %v868
    %v870 = vlaneseq
    %v871 = vshrl.u32 %v870, 7
    %v872 = vsub.s32 %v869, %v871
    %v873 = vrot.slane %v859, %v872
    %v874 = vcombine.low %v851, %v866
    %v875 = vcombine.high %v851, %v866
    %v877 = vunpack.c.l.s4 1934713408
    %v878 = vunpack.c.0.s8 %v877
    %v879 = vlaneseq
    %v880 = vshrl.u32 %v879, 7
    %v881 = vsub.s32 %v878, %v880
    %v882 = vrot.slane %v874, %v881
    %v884 = vunpack.c.l.s4 1934713408
    %v885 = vunpack.c.0.s8 %v884
    %v886 = vlaneseq
    %v887 = vshrl.u32 %v886, 7
    %v888 = vsub.s32 %v885, %v887
    %v889 = vrot.slane %v875, %v888
    %v890 = vcombine.low %v858, %v873
    %v891 = vcombine.high %v858, %v873
    %v893 = vunpack.c.l.s4 1934713408
    %v894 = vunpack.c.0.s8 %v893
    %v895 = vlaneseq
    %v896 = vshrl.u32 %v895, 7
    %v897 = vsub.s32 %v894, %v896
    %v898 = vrot.slane %v890, %v897
    %v900 = vunpack.c.l.s4 1934713408
    %v901 = vunpack.c.0.s8 %v900
    %v902 = vlaneseq
    %v903 = vshrl.u32 %v902, 7
    %v904 = vsub.s32 %v901, %v903
    %v905 = vrot.slane %v891, %v904
    %v906 = vcombine.high %v882, 0.0
    %v907 = vcombine.high %v889, 0.0
    %v908 = vcombine.high %v898, 0.0
    %v909 = vcombine.high %v905, 0.0
    %v910 = vcombine.high %v710, 0.0
    %v912 = vunpack.c.l.s4 1983009808
    %v913 = vunpack.c.0.s8 %v912
    %v914 = vlaneseq
    %v915 = vshrl.u32 %v914, 7
    %v916 = vsub.s32 %v913, %v915
    %v917 = vrot.slane %v710, %v916
    %v919 = vunpack.c.l.s4 1983009808
    %v920 = vunpack.c.0.s8 %v919
    %v921 = vlaneseq
    %v922 = vshrl.u32 %v921, 7
    %v923 = vsub.s32 %v920, %v922
    %v924 = vrot.slane %v910, %v923
    %v925 = vcombine.high %v711, 0.0
    %v927 = vunpack.c.l.s4 1983009808
    %v928 = vunpack.c.0.s8 %v927
    %v929 = vlaneseq
    %v930 = vshrl.u32 %v929, 7
    %v931 = vsub.s32 %v928, %v930
    %v932 = vrot.slane %v711, %v931
    %v934 = vunpack.c.l.s4 1983009808
    %v935 = vunpack.c.0.s8 %v934
    %v936 = vlaneseq
    %v937 = vshrl.u32 %v936, 7
    %v938 = vsub.s32 %v935, %v937
    %v939 = vrot.slane %v925, %v938
    %v940 = vcombine.low %v917, %v932
    %v941 = vcombine.high %v917, %v932
    %v943 = vunpack.c.l.s4 1934713408
    %v944 = vunpack.c.0.s8 %v943
    %v945 = vlaneseq
    %v946 = vshrl.u32 %v945, 7
    %v947 = vsub.s32 %v944, %v946
    %v948 = vrot.slane %v940, %v947
    %v950 = vunpack.c.l.s4 1934713408
    %v951 = vunpack.c.0.s8 %v950
    %v952 = vlaneseq
    %v953 = vshrl.u32 %v952, 7
    %v954 = vsub.s32 %v951, %v953
    %v955 = vrot.slane %v941, %v954
    %v956 = vcombine.low %v924, %v939
    %v957 = vcombine.high %v924, %v939
    %v959 = vunpack.c.l.s4 1934713408
    %v960 = vunpack.c.0.s8 %v959
    %v961 = vlaneseq
    %v962 = vshrl.u32 %v961, 7
    %v963 = vsub.s32 %v960, %v962
    %v964 = vrot.slane %v956, %v963
    %v966 = vunpack.c.l.s4 1934713408
    %v967 = vunpack.c.0.s8 %v966
    %v968 = vlaneseq
    %v969 = vshrl.u32 %v968, 7
    %v970 = vsub.s32 %v967, %v969
    %v971 = vrot.slane %v957, %v970
    %v972 = vcombine.high %v948, 0.0
    %v973 = vcombine.high %v955, 0.0
    %v974 = vcombine.high %v964, 0.0
    %v975 = vcombine.high %v971, 0.0
    %v976 = vlaneseq
    %v977 = vand.u32 %v976, 127
    %vm978 = vcmp.lt.s32.totalorder %v977, 16
    %v979 = vsel %vm978, 1, 0
    %vm980 = vcmp.eq.s32.totalorder %v979, 1
    %v981 = vsel %vm980, %v750, -1e+30
    %v982 = vsel %vm980, %v774, -1e+30
    %v983 = vsel %vm980, %v757, -1e+30
    %v984 = vsel %vm980, %v775, -1e+30
    %v985 = vsel %vm980, %v766, -1e+30
    %v986 = vsel %vm980, %v776, -1e+30
    %v987 = vsel %vm980, %v773, -1e+30
    %v988 = vsel %vm980, %v777, -1e+30
    %v989 = vsel %vm980, %v816, -1e+30
    %v990 = vsel %vm980, %v840, -1e+30
    %v991 = vsel %vm980, %v823, -1e+30
    %v992 = vsel %vm980, %v841, -1e+30
    %v993 = vsel %vm980, %v832, -1e+30
    %v994 = vsel %vm980, %v842, -1e+30
    %v995 = vsel %vm980, %v839, -1e+30
    %v996 = vsel %vm980, %v843, -1e+30
    %v997 = vsel %vm980, %v882, -1e+30
    %v998 = vsel %vm980, %v906, -1e+30
    %v999 = vsel %vm980, %v889, -1e+30
    %v1000 = vsel %vm980, %v907, -1e+30
    %v1001 = vsel %vm980, %v898, -1e+30
    %v1002 = vsel %vm980, %v908, -1e+30
    %v1003 = vsel %vm980, %v905, -1e+30
    %v1004 = vsel %vm980, %v909, -1e+30
    %v1005 = vsel %vm980, %v948, -1e+30
    %v1006 = vsel %vm980, %v972, -1e+30
    %v1007 = vsel %vm980, %v955, -1e+30
    %v1008 = vsel %vm980, %v973, -1e+30
    %v1009 = vsel %vm980, %v964, -1e+30
    %v1010 = vsel %vm980, %v974, -1e+30
    %v1011 = vsel %vm980, %v971, -1e+30
    %v1012 = vsel %vm980, %v975, -1e+30
    %vm1013 = vcmask 1041408
    %v1014 = vsel %vm1013, %v981, -inf
    %1015 = vmax.xlane.f32.xlu0 %v1014
    %v1016 = vpop.xlane.xlu0 %1015
    %v1017 = vsel %vm1013, %v982, -inf
    %1018 = vmax.xlane.f32.xlu0 %v1017
    %v1019 = vpop.xlane.xlu0 %1018
    %v1020 = vsel %vm1013, %v983, -inf
    %1021 = vmax.xlane.f32.xlu0 %v1020
    %v1022 = vpop.xlane.xlu0 %1021
    %v1023 = vsel %vm1013, %v984, -inf
    %1024 = vmax.xlane.f32.xlu0 %v1023
    %v1025 = vpop.xlane.xlu0 %1024
    %v1026 = vsel %vm1013, %v985, -inf
    %1027 = vmax.xlane.f32.xlu0 %v1026
    %v1028 = vpop.xlane.xlu0 %1027
    %v1029 = vsel %vm1013, %v986, -inf
    %1030 = vmax.xlane.f32.xlu0 %v1029
    %v1031 = vpop.xlane.xlu0 %1030
    %v1032 = vsel %vm1013, %v987, -inf
    %1033 = vmax.xlane.f32.xlu0 %v1032
    %v1034 = vpop.xlane.xlu0 %1033
    %v1035 = vsel %vm1013, %v988, -inf
    %1036 = vmax.xlane.f32.xlu0 %v1035
    %v1037 = vpop.xlane.xlu0 %1036
    %v1038 = vsel %vm1013, %v989, -inf
    %1039 = vmax.xlane.f32.xlu0 %v1038
    %v1040 = vpop.xlane.xlu0 %1039
    %v1041 = vsel %vm1013, %v990, -inf
    %1042 = vmax.xlane.f32.xlu0 %v1041
    %v1043 = vpop.xlane.xlu0 %1042
    %v1044 = vsel %vm1013, %v991, -inf
    %1045 = vmax.xlane.f32.xlu0 %v1044
    %v1046 = vpop.xlane.xlu0 %1045
    %v1047 = vsel %vm1013, %v992, -inf
    %1048 = vmax.xlane.f32.xlu0 %v1047
    %v1049 = vpop.xlane.xlu0 %1048
    %v1050 = vsel %vm1013, %v993, -inf
    %1051 = vmax.xlane.f32.xlu0 %v1050
    %v1052 = vpop.xlane.xlu0 %1051
    %v1053 = vsel %vm1013, %v994, -inf
    %1054 = vmax.xlane.f32.xlu0 %v1053
    %v1055 = vpop.xlane.xlu0 %1054
    %v1056 = vsel %vm1013, %v995, -inf
    %1057 = vmax.xlane.f32.xlu0 %v1056
    %v1058 = vpop.xlane.xlu0 %1057
    %v1059 = vsel %vm1013, %v996, -inf
    %1060 = vmax.xlane.f32.xlu0 %v1059
    %v1061 = vpop.xlane.xlu0 %1060
    %v1062 = vsel %vm1013, %v997, -inf
    %1063 = vmax.xlane.f32.xlu0 %v1062
    %v1064 = vpop.xlane.xlu0 %1063
    %v1065 = vsel %vm1013, %v998, -inf
    %1066 = vmax.xlane.f32.xlu0 %v1065
    %v1067 = vpop.xlane.xlu0 %1066
    %v1068 = vsel %vm1013, %v999, -inf
    %1069 = vmax.xlane.f32.xlu0 %v1068
    %v1070 = vpop.xlane.xlu0 %1069
    %v1071 = vsel %vm1013, %v1000, -inf
    %1072 = vmax.xlane.f32.xlu0 %v1071
    %v1073 = vpop.xlane.xlu0 %1072
    %v1074 = vsel %vm1013, %v1001, -inf
    %1075 = vmax.xlane.f32.xlu0 %v1074
    %v1076 = vpop.xlane.xlu0 %1075
    %v1077 = vsel %vm1013, %v1002, -inf
    %1078 = vmax.xlane.f32.xlu0 %v1077
    %v1079 = vpop.xlane.xlu0 %1078
    %v1080 = vsel %vm1013, %v1003, -inf
    %1081 = vmax.xlane.f32.xlu0 %v1080
    %v1082 = vpop.xlane.xlu0 %1081
    %v1083 = vsel %vm1013, %v1004, -inf
    %1084 = vmax.xlane.f32.xlu0 %v1083
    %v1085 = vpop.xlane.xlu0 %1084
    %v1086 = vsel %vm1013, %v1005, -inf
    %1087 = vmax.xlane.f32.xlu0 %v1086
    %v1088 = vpop.xlane.xlu0 %1087
    %v1089 = vsel %vm1013, %v1006, -inf
    %1090 = vmax.xlane.f32.xlu0 %v1089
    %v1091 = vpop.xlane.xlu0 %1090
    %v1092 = vsel %vm1013, %v1007, -inf
    %1093 = vmax.xlane.f32.xlu0 %v1092
    %v1094 = vpop.xlane.xlu0 %1093
    %v1095 = vsel %vm1013, %v1008, -inf
    %1096 = vmax.xlane.f32.xlu0 %v1095
    %v1097 = vpop.xlane.xlu0 %1096
    %v1098 = vsel %vm1013, %v1009, -inf
    %1099 = vmax.xlane.f32.xlu0 %v1098
    %v1100 = vpop.xlane.xlu0 %1099
    %v1101 = vsel %vm1013, %v1010, -inf
    %1102 = vmax.xlane.f32.xlu0 %v1101
    %v1103 = vpop.xlane.xlu0 %1102
    %v1104 = vsel %vm1013, %v1011, -inf
    %1105 = vmax.xlane.f32.xlu0 %v1104
    %v1106 = vpop.xlane.xlu0 %1105
    %v1107 = vsel %vm1013, %v1012, -inf
    %1108 = vmax.xlane.f32.xlu0 %v1107
    %v1109 = vpop.xlane.xlu0 %1108
    %s1110 = scalar_lea.vmem [#allocation5], 96
    %v1111 = vld [vmem:[%s1110] sm:$0xf]
    %v1112 = vld [vmem:[%s1110 + $0x4] sm:$0xf]
    %v1113 = vld [vmem:[%s1110 + $0x8] sm:$0xf]
    %v1114 = vld [vmem:[%s1110 + $0xc] sm:$0xf]
    %v1115 = vpack.c.bf16 %v1016, %v1016
    %v1116 = vpack.c.bf16 %v1019, %v1019
    %v1117 = vpack.c.bf16 %v1022, %v1022
    %v1118 = vpack.c.bf16 %v1025, %v1025
    %v1119 = vpack.c.bf16 %v1028, %v1028
    %v1120 = vpack.c.bf16 %v1031, %v1031
    %v1121 = vpack.c.bf16 %v1034, %v1034
    %v1122 = vpack.c.bf16 %v1037, %v1037
    %v1123 = vpack.c.bf16 %v1040, %v1040
    %v1124 = vpack.c.bf16 %v1043, %v1043
    %v1125 = vpack.c.bf16 %v1046, %v1046
    %v1126 = vpack.c.bf16 %v1049, %v1049
    %v1127 = vpack.c.bf16 %v1052, %v1052
    %v1128 = vpack.c.bf16 %v1055, %v1055
    %v1129 = vpack.c.bf16 %v1058, %v1058
    %v1130 = vpack.c.bf16 %v1061, %v1061
    %v1131 = vpack.c.bf16 %v1064, %v1064
    %v1132 = vpack.c.bf16 %v1067, %v1067
    %v1133 = vpack.c.bf16 %v1070, %v1070
    %v1134 = vpack.c.bf16 %v1073, %v1073
    %v1135 = vpack.c.bf16 %v1076, %v1076
    %v1136 = vpack.c.bf16 %v1079, %v1079
    %v1137 = vpack.c.bf16 %v1082, %v1082
    %v1138 = vpack.c.bf16 %v1085, %v1085
    %v1139 = vpack.c.bf16 %v1088, %v1088
    %v1140 = vpack.c.bf16 %v1091, %v1091
    %v1141 = vpack.c.bf16 %v1094, %v1094
    %v1142 = vpack.c.bf16 %v1097, %v1097
    %v1143 = vpack.c.bf16 %v1100, %v1100
    %v1144 = vpack.c.bf16 %v1103, %v1103
    %v1145 = vpack.c.bf16 %v1106, %v1106
    %v1146 = vpack.c.bf16 %v1109, %v1109
    %s1147 = scalar_lea.vmem [#allocation7], 192
    %v1148 = vld [vmem:[%s1147] sm:$0xff]
    %v1149 = vld [vmem:[%s1147 + $0x8] sm:$0xff]
    %v1150 = vld [vmem:[%s1147 + $0x10] sm:$0xff]
    %v1151 = vld [vmem:[%s1147 + $0x18] sm:$0xff]
    %1153 = vset.pattern.permute.xlu0 0
    %1154 = vperm.xlu0 %1153, %v1148
    %v1155 = vpop.permute.xlu0 %1154
    %1158 = vset.pattern.permute.xlu0 0
    %1159 = vperm.xlu0 %1158, %v1149
    %v1160 = vpop.permute.xlu0 %1159
    %1163 = vset.pattern.permute.xlu0 0
    %1164 = vperm.xlu0 %1163, %v1150
    %v1165 = vpop.permute.xlu0 %1164
    %1168 = vset.pattern.permute.xlu0 0
    %1169 = vperm.xlu0 %1168, %v1151
    %v1170 = vpop.permute.xlu0 %1169
    %v1176 = vunpack.c.l.b16 %v1111
    %v1177 = vunpack.c.l.b16 %v1112
    %v1178 = vunpack.c.l.b16 %v1113
    %v1179 = vunpack.c.l.b16 %v1114
    %v1180 = vpack.c.b16 %v1177, %v1176
    %v1181 = vpack.c.b16 %v1179, %v1178
    %v1214 = vunpack.c.l.b16 %v1115
    %v1215 = vunpack.c.l.b16 %v1116
    %v1216 = vunpack.c.l.b16 %v1117
    %v1217 = vunpack.c.l.b16 %v1118
    %v1218 = vunpack.c.l.b16 %v1119
    %v1219 = vunpack.c.l.b16 %v1120
    %v1220 = vunpack.c.l.b16 %v1121
    %v1221 = vunpack.c.l.b16 %v1122
    %v1222 = vunpack.c.l.b16 %v1123
    %v1223 = vunpack.c.l.b16 %v1124
    %v1224 = vunpack.c.l.b16 %v1125
    %v1225 = vunpack.c.l.b16 %v1126
    %v1226 = vunpack.c.l.b16 %v1127
    %v1227 = vunpack.c.l.b16 %v1128
    %v1228 = vunpack.c.l.b16 %v1129
    %v1229 = vunpack.c.l.b16 %v1130
    %v1230 = vunpack.c.l.b16 %v1131
    %v1231 = vunpack.c.l.b16 %v1132
    %v1232 = vunpack.c.l.b16 %v1133
    %v1233 = vunpack.c.l.b16 %v1134
    %v1234 = vunpack.c.l.b16 %v1135
    %v1235 = vunpack.c.l.b16 %v1136
    %v1236 = vunpack.c.l.b16 %v1137
    %v1237 = vunpack.c.l.b16 %v1138
    %v1238 = vunpack.c.l.b16 %v1139
    %v1239 = vunpack.c.l.b16 %v1140
    %v1240 = vunpack.c.l.b16 %v1141
    %v1241 = vunpack.c.l.b16 %v1142
    %v1242 = vunpack.c.l.b16 %v1143
    %v1243 = vunpack.c.l.b16 %v1144
    %v1244 = vunpack.c.l.b16 %v1145
    %v1245 = vunpack.c.l.b16 %v1146
    %v1246 = vlaneseq
    %v1247 = vshrl.u32 %v1246, 7
    %v1248 = vsub.s32 %v977, %v1247
    %v1249 = vrot.slane %v1214, %v1248
    %v1250 = vlaneseq
    %v1251 = vshrl.u32 %v1250, 7
    %v1252 = vsub.s32 %v977, %v1251
    %v1253 = vrot.slane %v1215, %v1252
    %v1254 = vlaneseq
    %v1255 = vshrl.u32 %v1254, 7
    %v1256 = vsub.s32 %v977, %v1255
    %v1257 = vrot.slane %v1216, %v1256
    %v1258 = vlaneseq
    %v1259 = vshrl.u32 %v1258, 7
    %v1260 = vsub.s32 %v977, %v1259
    %v1261 = vrot.slane %v1217, %v1260
    %v1262 = vlaneseq
    %v1263 = vshrl.u32 %v1262, 7
    %v1264 = vsub.s32 %v977, %v1263
    %v1265 = vrot.slane %v1218, %v1264
    %v1266 = vlaneseq
    %v1267 = vshrl.u32 %v1266, 7
    %v1268 = vsub.s32 %v977, %v1267
    %v1269 = vrot.slane %v1219, %v1268
    %v1270 = vlaneseq
    %v1271 = vshrl.u32 %v1270, 7
    %v1272 = vsub.s32 %v977, %v1271
    %v1273 = vrot.slane %v1220, %v1272
    %v1274 = vlaneseq
    %v1275 = vshrl.u32 %v1274, 7
    %v1276 = vsub.s32 %v977, %v1275
    %v1277 = vrot.slane %v1221, %v1276
    %v1278 = vlaneseq
    %v1279 = vshrl.u32 %v1278, 7
    %v1280 = vsub.s32 %v977, %v1279
    %v1281 = vrot.slane %v1222, %v1280
    %v1282 = vlaneseq
    %v1283 = vshrl.u32 %v1282, 7
    %v1284 = vsub.s32 %v977, %v1283
    %v1285 = vrot.slane %v1223, %v1284
    %v1286 = vlaneseq
    %v1287 = vshrl.u32 %v1286, 7
    %v1288 = vsub.s32 %v977, %v1287
    %v1289 = vrot.slane %v1224, %v1288
    %v1290 = vlaneseq
    %v1291 = vshrl.u32 %v1290, 7
    %v1292 = vsub.s32 %v977, %v1291
    %v1293 = vrot.slane %v1225, %v1292
    %v1294 = vlaneseq
    %v1295 = vshrl.u32 %v1294, 7
    %v1296 = vsub.s32 %v977, %v1295
    %v1297 = vrot.slane %v1226, %v1296
    %v1298 = vlaneseq
    %v1299 = vshrl.u32 %v1298, 7
    %v1300 = vsub.s32 %v977, %v1299
    %v1301 = vrot.slane %v1227, %v1300
    %v1302 = vlaneseq
    %v1303 = vshrl.u32 %v1302, 7
    %v1304 = vsub.s32 %v977, %v1303
    %v1305 = vrot.slane %v1228, %v1304
    %v1306 = vlaneseq
    %v1307 = vshrl.u32 %v1306, 7
    %v1308 = vsub.s32 %v977, %v1307
    %v1309 = vrot.slane %v1229, %v1308
    %v1310 = vlaneseq
    %v1311 = vshrl.u32 %v1310, 7
    %v1312 = vsub.s32 %v977, %v1311
    %v1313 = vrot.slane %v1230, %v1312
    %v1314 = vlaneseq
    %v1315 = vshrl.u32 %v1314, 7
    %v1316 = vsub.s32 %v977, %v1315
    %v1317 = vrot.slane %v1231, %v1316
    %v1318 = vlaneseq
    %v1319 = vshrl.u32 %v1318, 7
    %v1320 = vsub.s32 %v977, %v1319
    %v1321 = vrot.slane %v1232, %v1320
    %v1322 = vlaneseq
    %v1323 = vshrl.u32 %v1322, 7
    %v1324 = vsub.s32 %v977, %v1323
    %v1325 = vrot.slane %v1233, %v1324
    %v1326 = vlaneseq
    %v1327 = vshrl.u32 %v1326, 7
    %v1328 = vsub.s32 %v977, %v1327
    %v1329 = vrot.slane %v1234, %v1328
    %v1330 = vlaneseq
    %v1331 = vshrl.u32 %v1330, 7
    %v1332 = vsub.s32 %v977, %v1331
    %v1333 = vrot.slane %v1235, %v1332
    %v1334 = vlaneseq
    %v1335 = vshrl.u32 %v1334, 7
    %v1336 = vsub.s32 %v977, %v1335
    %v1337 = vrot.slane %v1236, %v1336
    %v1338 = vlaneseq
    %v1339 = vshrl.u32 %v1338, 7
    %v1340 = vsub.s32 %v977, %v1339
    %v1341 = vrot.slane %v1237, %v1340
    %v1342 = vlaneseq
    %v1343 = vshrl.u32 %v1342, 7
    %v1344 = vsub.s32 %v977, %v1343
    %v1345 = vrot.slane %v1238, %v1344
    %v1346 = vlaneseq
    %v1347 = vshrl.u32 %v1346, 7
    %v1348 = vsub.s32 %v977, %v1347
    %v1349 = vrot.slane %v1239, %v1348
    %v1350 = vlaneseq
    %v1351 = vshrl.u32 %v1350, 7
    %v1352 = vsub.s32 %v977, %v1351
    %v1353 = vrot.slane %v1240, %v1352
    %v1354 = vlaneseq
    %v1355 = vshrl.u32 %v1354, 7
    %v1356 = vsub.s32 %v977, %v1355
    %v1357 = vrot.slane %v1241, %v1356
    %v1358 = vlaneseq
    %v1359 = vshrl.u32 %v1358, 7
    %v1360 = vsub.s32 %v977, %v1359
    %v1361 = vrot.slane %v1242, %v1360
    %v1362 = vlaneseq
    %v1363 = vshrl.u32 %v1362, 7
    %v1364 = vsub.s32 %v977, %v1363
    %v1365 = vrot.slane %v1243, %v1364
    %v1366 = vlaneseq
    %v1367 = vshrl.u32 %v1366, 7
    %v1368 = vsub.s32 %v977, %v1367
    %v1369 = vrot.slane %v1244, %v1368
    %v1370 = vlaneseq
    %v1371 = vshrl.u32 %v1370, 7
    %v1372 = vsub.s32 %v977, %v1371
    %v1373 = vrot.slane %v1245, %v1372
    %vm1374 = vcmask 1041409
    %v1375 = vsel %vm1374, %v1253, %v1249
    %vm1376 = vcmask 1042434
    %v1377 = vsel %vm1376, %v1257, %v1375
    %vm1378 = vcmask 1043459
    %v1379 = vsel %vm1378, %v1261, %v1377
    %vm1380 = vcmask 1044484
    %v1381 = vsel %vm1380, %v1265, %v1379
    %vm1382 = vcmask 1045509
    %v1383 = vsel %vm1382, %v1269, %v1381
    %vm1384 = vcmask 1046534
    %v1385 = vsel %vm1384, %v1273, %v1383
    %vm1386 = vcmask 1047559
    %v1387 = vsel %vm1386, %v1277, %v1385
    %v1388 = vsel %vm1374, %v1285, %v1281
    %v1389 = vsel %vm1376, %v1289, %v1388
    %v1390 = vsel %vm1378, %v1293, %v1389
    %v1391 = vsel %vm1380, %v1297, %v1390
    %v1392 = vsel %vm1382, %v1301, %v1391
    %v1393 = vsel %vm1384, %v1305, %v1392
    %v1394 = vsel %vm1386, %v1309, %v1393
    %v1395 = vsel %vm1374, %v1317, %v1313
    %v1396 = vsel %vm1376, %v1321, %v1395
    %v1397 = vsel %vm1378, %v1325, %v1396
    %v1398 = vsel %vm1380, %v1329, %v1397
    %v1399 = vsel %vm1382, %v1333, %v1398
    %v1400 = vsel %vm1384, %v1337, %v1399
    %v1401 = vsel %vm1386, %v1341, %v1400
    %v1402 = vsel %vm1374, %v1349, %v1345
    %v1403 = vsel %vm1376, %v1353, %v1402
    %v1404 = vsel %vm1378, %v1357, %v1403
    %v1405 = vsel %vm1380, %v1361, %v1404
    %v1406 = vsel %vm1382, %v1365, %v1405
    %v1407 = vsel %vm1384, %v1369, %v1406
    %v1408 = vsel %vm1386, %v1373, %v1407
    %v1409 = vpack.c.b16 %v1394, %v1387
    %v1410 = vpack.c.b16 %v1408, %v1401
    %vm1413 = vcmask 261120
    %v1415 = vsel %vm1413, %v1180, 0
    %v1418 = vsel %vm1413, %v1181, 0
    %1420 = vmatprep.subr.bf16.mxu0 0
    %1421 = vmatpush1.bf16.msra.mxu0 %v1409
    %1422 = vmatprep.subr.bf16.mxu0 0
    %1423 = vmatpush1.bf16.msra.mxu0 %v1410
    %1424 = vmatprep.subr.bf16.mxu0 0
    %1425 = vmatpush1.bf16.msra.mxu0 0
    %1426 = vmatprep.subr.bf16.mxu0 0
    %1427 = vmatpush1.bf16.msra.mxu0 0
    %1428 = vmatprep.subr.bf16.mxu0 0
    %1429 = vmatpush1.bf16.msra.mxu0 0
    %1430 = vmatprep.subr.bf16.mxu0 0
    %1431 = vmatpush1.bf16.msra.mxu0 0
    %1432 = vmatprep.subr.bf16.mxu0 0
    %1433 = vmatpush1.bf16.msra.mxu0 0
    %1434 = vmatprep.subr.bf16.mxu0 0
    %1435 = vmatpush1.bf16.msra.mxu0 0
    %1436 = vmatprep.subr.bf16.mxu0 0
    %1437 = vmatpush1.bf16.msra.mxu0 0
    %1438 = vmatprep.subr.bf16.mxu0 0
    %1439 = vmatpush1.bf16.msra.mxu0 0
    %1440 = vmatprep.subr.bf16.mxu0 0
    %1441 = vmatpush1.bf16.msra.mxu0 0
    %1442 = vmatprep.subr.bf16.mxu0 0
    %1443 = vmatpush1.bf16.msra.mxu0 0
    %1444 = vmatprep.subr.bf16.mxu0 0
    %1445 = vmatpush1.bf16.msra.mxu0 0
    %1446 = vmatprep.subr.bf16.mxu0 0
    %1447 = vmatpush1.bf16.msra.mxu0 0
    %1448 = vmatprep.subr.bf16.mxu0 0
    %1449 = vmatpush1.bf16.msra.mxu0 0
    %1450 = vmatprep.subr.bf16.mxu0 0
    %1451 = vmatpush1.bf16.msra.mxu0 0
    %1452 = vmatprep.mubr.bf16.mxu0 0
    %1453 = vmatmul.mubr.bf16.gmra.mrb[0].mxu0 %v1415
    %v1454 = vpop.f32.mrb[0].mxu0
    %v1455 = vadd.f32 %v1155, %v1454
    %v1456 = vpop.f32.mrb[0].mxu0
    %v1457 = vpop.f32.mrb[0].mxu0
    %v1458 = vadd.f32 %v1160, %v1457
    %v1459 = vpop.f32.mrb[0].mxu0
    %1460 = vmatprep.mubr.bf16.mxu0 0
    %1461 = vmatmul.mubr.bf16.gmra.mrb[0].mxu0 %v1418
    %v1462 = vpop.f32.mrb[0].mxu0
    %v1463 = vadd.f32 %v1165, %v1462
    %v1464 = vpop.f32.mrb[0].mxu0
    %v1465 = vpop.f32.mrb[0].mxu0
    %v1466 = vadd.f32 %v1170, %v1465
    %v1467 = vpop.f32.mrb[0].mxu0
    %1468 = vdwg.mxu0
    %s1469 = scalar_lea.vmem [#allocation5], 80
    %v1470 = vld [vmem:[%s1469] sm:$0xf]
    %v1471 = vld [vmem:[%s1469 + $0x4] sm:$0xf]
    %v1472 = vld [vmem:[%s1469 + $0x8] sm:$0xf]
    %v1473 = vld [vmem:[%s1469 + $0xc] sm:$0xf]
    %v1474 = vpack.c.bf16 %v700, %v696
    %v1475 = vpack.c.bf16 %v701, %v697
    %v1476 = vpack.c.bf16 %v708, %v704
    %v1477 = vpack.c.bf16 %v709, %v705
    %s1478 = scalar_lea.vmem [#allocation7], 160
    %v1479 = vld [vmem:[%s1478] sm:$0xff]
    %v1480 = vld [vmem:[%s1478 + $0x8] sm:$0xff]
    %v1481 = vld [vmem:[%s1478 + $0x10] sm:$0xff]
    %v1482 = vld [vmem:[%s1478 + $0x18] sm:$0xff]
    %1484 = vset.pattern.permute.xlu0 0
    %1485 = vperm.xlu0 %1484, %v1479
    %v1486 = vpop.permute.xlu0 %1485
    %1489 = vset.pattern.permute.xlu0 0
    %1490 = vperm.xlu0 %1489, %v1480
    %v1491 = vpop.permute.xlu0 %1490
    %1494 = vset.pattern.permute.xlu0 0
    %1495 = vperm.xlu0 %1494, %v1481
    %v1496 = vpop.permute.xlu0 %1495
    %1499 = vset.pattern.permute.xlu0 0
    %1500 = vperm.xlu0 %1499, %v1482
    %v1501 = vpop.permute.xlu0 %1500
    %v1507 = vunpack.c.l.b16 %v1470
    %v1508 = vunpack.c.l.b16 %v1471
    %v1509 = vunpack.c.l.b16 %v1472
    %v1510 = vunpack.c.l.b16 %v1473
    %v1511 = vpack.c.b16 %v1508, %v1507
    %v1512 = vpack.c.b16 %v1510, %v1509
    %v1514 = vsel %vm1413, %v1511, 0
    %v1517 = vsel %vm1413, %v1512, 0
    %1519 = vmatprep.subr.bf16.mxu0 %v1475
    %1520 = vmatpush1.bf16.msra.mxu0 %v1474
    %1521 = vmatprep.subr.bf16.mxu0 %v1477
    %1522 = vmatpush1.bf16.msra.mxu0 %v1476
    %1523 = vmatprep.subr.bf16.mxu0 0
    %1524 = vmatpush1.bf16.msra.mxu0 0
    %1525 = vmatprep.subr.bf16.mxu0 0
    %1526 = vmatpush1.bf16.msra.mxu0 0
    %1527 = vmatprep.subr.bf16.mxu0 0
    %1528 = vmatpush1.bf16.msra.mxu0 0
    %1529 = vmatprep.subr.bf16.mxu0 0
    %1530 = vmatpush1.bf16.msra.mxu0 0
    %1531 = vmatprep.subr.bf16.mxu0 0
    %1532 = vmatpush1.bf16.msra.mxu0 0
    %1533 = vmatprep.subr.bf16.mxu0 0
    %1534 = vmatpush1.bf16.msra.mxu0 0
    %1535 = vmatprep.subr.bf16.mxu0 0
    %1536 = vmatpush1.bf16.msra.mxu0 0
    %1537 = vmatprep.subr.bf16.mxu0 0
    %1538 = vmatpush1.bf16.msra.mxu0 0
    %1539 = vmatprep.subr.bf16.mxu0 0
    %1540 = vmatpush1.bf16.msra.mxu0 0
    %1541 = vmatprep.subr.bf16.mxu0 0
    %1542 = vmatpush1.bf16.msra.mxu0 0
    %1543 = vmatprep.subr.bf16.mxu0 0
    %1544 = vmatpush1.bf16.msra.mxu0 0
    %1545 = vmatprep.subr.bf16.mxu0 0
    %1546 = vmatpush1.bf16.msra.mxu0 0
    %1547 = vmatprep.subr.bf16.mxu0 0
    %1548 = vmatpush1.bf16.msra.mxu0 0
    %1549 = vmatprep.subr.bf16.mxu0 0
    %1550 = vmatpush1.bf16.msra.mxu0 0
    %1551 = vmatprep.mubr.bf16.mxu0 0
    %1552 = vmatmul.mubr.bf16.gmra.mrb[0].mxu0 %v1514
    %v1553 = vpop.f32.mrb[0].mxu0
    %v1554 = vadd.f32 %v1486, %v1553
    %v1555 = vpop.f32.mrb[0].mxu0
    %v1556 = vadd.f32 %v1486, %v1555
    %v1557 = vpop.f32.mrb[0].mxu0
    %v1558 = vadd.f32 %v1491, %v1557
    %v1559 = vpop.f32.mrb[0].mxu0
    %v1560 = vadd.f32 %v1491, %v1559
    %1561 = vmatprep.mubr.bf16.mxu0 0
    %1562 = vmatmul.mubr.bf16.gmra.mrb[0].mxu0 %v1517
    %v1563 = vpop.f32.mrb[0].mxu0
    %v1564 = vadd.f32 %v1496, %v1563
    %v1565 = vpop.f32.mrb[0].mxu0
    %v1566 = vadd.f32 %v1496, %v1565
    %v1567 = vpop.f32.mrb[0].mxu0
    %v1568 = vadd.f32 %v1501, %v1567
    %v1569 = vpop.f32.mrb[0].mxu0
    %v1570 = vadd.f32 %v1501, %v1569
    %1571 = vdwg.mxu0
    %v1572 = vcombine.high %v1554, 0.0
    %v1574 = vunpack.c.l.s4 1983009808
    %v1575 = vunpack.c.0.s8 %v1574
    %v1576 = vlaneseq
    %v1577 = vshrl.u32 %v1576, 7
    %v1578 = vsub.s32 %v1575, %v1577
    %v1579 = vrot.slane %v1554, %v1578
    %v1581 = vunpack.c.l.s4 1983009808
    %v1582 = vunpack.c.0.s8 %v1581
    %v1583 = vlaneseq
    %v1584 = vshrl.u32 %v1583, 7
    %v1585 = vsub.s32 %v1582, %v1584
    %v1586 = vrot.slane %v1572, %v1585
    %v1587 = vcombine.high %v1556, 0.0
    %v1589 = vunpack.c.l.s4 1983009808
    %v1590 = vunpack.c.0.s8 %v1589
    %v1591 = vlaneseq
    %v1592 = vshrl.u32 %v1591, 7
    %v1593 = vsub.s32 %v1590, %v1592
    %v1594 = vrot.slane %v1556, %v1593
    %v1596 = vunpack.c.l.s4 1983009808
    %v1597 = vunpack.c.0.s8 %v1596
    %v1598 = vlaneseq
    %v1599 = vshrl.u32 %v1598, 7
    %v1600 = vsub.s32 %v1597, %v1599
    %v1601 = vrot.slane %v1587, %v1600
    %v1602 = vcombine.low %v1579, %v1594
    %v1603 = vcombine.high %v1579, %v1594
    %v1605 = vunpack.c.l.s4 1934713408
    %v1606 = vunpack.c.0.s8 %v1605
    %v1607 = vlaneseq
    %v1608 = vshrl.u32 %v1607, 7
    %v1609 = vsub.s32 %v1606, %v1608
    %v1610 = vrot.slane %v1602, %v1609
    %v1612 = vunpack.c.l.s4 1934713408
    %v1613 = vunpack.c.0.s8 %v1612
    %v1614 = vlaneseq
    %v1615 = vshrl.u32 %v1614, 7
    %v1616 = vsub.s32 %v1613, %v1615
    %v1617 = vrot.slane %v1603, %v1616
    %v1618 = vcombine.low %v1586, %v1601
    %v1619 = vcombine.high %v1586, %v1601
    %v1621 = vunpack.c.l.s4 1934713408
    %v1622 = vunpack.c.0.s8 %v1621
    %v1623 = vlaneseq
    %v1624 = vshrl.u32 %v1623, 7
    %v1625 = vsub.s32 %v1622, %v1624
    %v1626 = vrot.slane %v1618, %v1625
    %v1628 = vunpack.c.l.s4 1934713408
    %v1629 = vunpack.c.0.s8 %v1628
    %v1630 = vlaneseq
    %v1631 = vshrl.u32 %v1630, 7
    %v1632 = vsub.s32 %v1629, %v1631
    %v1633 = vrot.slane %v1619, %v1632
    %v1634 = vcombine.high %v1610, 0.0
    %v1635 = vcombine.high %v1617, 0.0
    %v1636 = vcombine.high %v1626, 0.0
    %v1637 = vcombine.high %v1633, 0.0
    %v1638 = vcombine.high %v1558, 0.0
    %v1640 = vunpack.c.l.s4 1983009808
    %v1641 = vunpack.c.0.s8 %v1640
    %v1642 = vlaneseq
    %v1643 = vshrl.u32 %v1642, 7
    %v1644 = vsub.s32 %v1641, %v1643
    %v1645 = vrot.slane %v1558, %v1644
    %v1647 = vunpack.c.l.s4 1983009808
    %v1648 = vunpack.c.0.s8 %v1647
    %v1649 = vlaneseq
    %v1650 = vshrl.u32 %v1649, 7
    %v1651 = vsub.s32 %v1648, %v1650
    %v1652 = vrot.slane %v1638, %v1651
    %v1653 = vcombine.high %v1560, 0.0
    %v1655 = vunpack.c.l.s4 1983009808
    %v1656 = vunpack.c.0.s8 %v1655
    %v1657 = vlaneseq
    %v1658 = vshrl.u32 %v1657, 7
    %v1659 = vsub.s32 %v1656, %v1658
    %v1660 = vrot.slane %v1560, %v1659
    %v1662 = vunpack.c.l.s4 1983009808
    %v1663 = vunpack.c.0.s8 %v1662
    %v1664 = vlaneseq
    %v1665 = vshrl.u32 %v1664, 7
    %v1666 = vsub.s32 %v1663, %v1665
    %v1667 = vrot.slane %v1653, %v1666
    %v1668 = vcombine.low %v1645, %v1660
    %v1669 = vcombine.high %v1645, %v1660
    %v1671 = vunpack.c.l.s4 1934713408
    %v1672 = vunpack.c.0.s8 %v1671
    %v1673 = vlaneseq
    %v1674 = vshrl.u32 %v1673, 7
    %v1675 = vsub.s32 %v1672, %v1674
    %v1676 = vrot.slane %v1668, %v1675
    %v1678 = vunpack.c.l.s4 1934713408
    %v1679 = vunpack.c.0.s8 %v1678
    %v1680 = vlaneseq
    %v1681 = vshrl.u32 %v1680, 7
    %v1682 = vsub.s32 %v1679, %v1681
    %v1683 = vrot.slane %v1669, %v1682
    %v1684 = vcombine.low %v1652, %v1667
    %v1685 = vcombine.high %v1652, %v1667
    %v1687 = vunpack.c.l.s4 1934713408
    %v1688 = vunpack.c.0.s8 %v1687
    %v1689 = vlaneseq
    %v1690 = vshrl.u32 %v1689, 7
    %v1691 = vsub.s32 %v1688, %v1690
    %v1692 = vrot.slane %v1684, %v1691
    %v1694 = vunpack.c.l.s4 1934713408
    %v1695 = vunpack.c.0.s8 %v1694
    %v1696 = vlaneseq
    %v1697 = vshrl.u32 %v1696, 7
    %v1698 = vsub.s32 %v1695, %v1697
    %v1699 = vrot.slane %v1685, %v1698
    %v1700 = vcombine.high %v1676, 0.0
    %v1701 = vcombine.high %v1683, 0.0
    %v1702 = vcombine.high %v1692, 0.0
    %v1703 = vcombine.high %v1699, 0.0
    %v1704 = vcombine.high %v1564, 0.0
    %v1706 = vunpack.c.l.s4 1983009808
    %v1707 = vunpack.c.0.s8 %v1706
    %v1708 = vlaneseq
    %v1709 = vshrl.u32 %v1708, 7
    %v1710 = vsub.s32 %v1707, %v1709
    %v1711 = vrot.slane %v1564, %v1710
    %v1713 = vunpack.c.l.s4 1983009808
    %v1714 = vunpack.c.0.s8 %v1713
    %v1715 = vlaneseq
    %v1716 = vshrl.u32 %v1715, 7
    %v1717 = vsub.s32 %v1714, %v1716
    %v1718 = vrot.slane %v1704, %v1717
    %v1719 = vcombine.high %v1566, 0.0
    %v1721 = vunpack.c.l.s4 1983009808
    %v1722 = vunpack.c.0.s8 %v1721
    %v1723 = vlaneseq
    %v1724 = vshrl.u32 %v1723, 7
    %v1725 = vsub.s32 %v1722, %v1724
    %v1726 = vrot.slane %v1566, %v1725
    %v1728 = vunpack.c.l.s4 1983009808
    %v1729 = vunpack.c.0.s8 %v1728
    %v1730 = vlaneseq
    %v1731 = vshrl.u32 %v1730, 7
    %v1732 = vsub.s32 %v1729, %v1731
    %v1733 = vrot.slane %v1719, %v1732
    %v1734 = vcombine.low %v1711, %v1726
    %v1735 = vcombine.high %v1711, %v1726
    %v1737 = vunpack.c.l.s4 1934713408
    %v1738 = vunpack.c.0.s8 %v1737
    %v1739 = vlaneseq
    %v1740 = vshrl.u32 %v1739, 7
    %v1741 = vsub.s32 %v1738, %v1740
    %v1742 = vrot.slane %v1734, %v1741
    %v1744 = vunpack.c.l.s4 1934713408
    %v1745 = vunpack.c.0.s8 %v1744
    %v1746 = vlaneseq
    %v1747 = vshrl.u32 %v1746, 7
    %v1748 = vsub.s32 %v1745, %v1747
    %v1749 = vrot.slane %v1735, %v1748
    %v1750 = vcombine.low %v1718, %v1733
    %v1751 = vcombine.high %v1718, %v1733
    %v1753 = vunpack.c.l.s4 1934713408
    %v1754 = vunpack.c.0.s8 %v1753
    %v1755 = vlaneseq
    %v1756 = vshrl.u32 %v1755, 7
    %v1757 = vsub.s32 %v1754, %v1756
    %v1758 = vrot.slane %v1750, %v1757
    %v1760 = vunpack.c.l.s4 1934713408
    %v1761 = vunpack.c.0.s8 %v1760
    %v1762 = vlaneseq
    %v1763 = vshrl.u32 %v1762, 7
    %v1764 = vsub.s32 %v1761, %v1763
    %v1765 = vrot.slane %v1751, %v1764
    %v1766 = vcombine.high %v1742, 0.0
    %v1767 = vcombine.high %v1749, 0.0
    %v1768 = vcombine.high %v1758, 0.0
    %v1769 = vcombine.high %v1765, 0.0
    %v1770 = vcombine.high %v1568, 0.0
    %v1772 = vunpack.c.l.s4 1983009808
    %v1773 = vunpack.c.0.s8 %v1772
    %v1774 = vlaneseq
    %v1775 = vshrl.u32 %v1774, 7
    %v1776 = vsub.s32 %v1773, %v1775
    %v1777 = vrot.slane %v1568, %v1776
    %v1779 = vunpack.c.l.s4 1983009808
    %v1780 = vunpack.c.0.s8 %v1779
    %v1781 = vlaneseq
    %v1782 = vshrl.u32 %v1781, 7
    %v1783 = vsub.s32 %v1780, %v1782
    %v1784 = vrot.slane %v1770, %v1783
    %v1785 = vcombine.high %v1570, 0.0
    %v1787 = vunpack.c.l.s4 1983009808
    %v1788 = vunpack.c.0.s8 %v1787
    %v1789 = vlaneseq
    %v1790 = vshrl.u32 %v1789, 7
    %v1791 = vsub.s32 %v1788, %v1790
    %v1792 = vrot.slane %v1570, %v1791
    %v1794 = vunpack.c.l.s4 1983009808
    %v1795 = vunpack.c.0.s8 %v1794
    %v1796 = vlaneseq
    %v1797 = vshrl.u32 %v1796, 7
    %v1798 = vsub.s32 %v1795, %v1797
    %v1799 = vrot.slane %v1785, %v1798
    %v1800 = vcombine.low %v1777, %v1792
    %v1801 = vcombine.high %v1777, %v1792
    %v1803 = vunpack.c.l.s4 1934713408
    %v1804 = vunpack.c.0.s8 %v1803
    %v1805 = vlaneseq
    %v1806 = vshrl.u32 %v1805, 7
    %v1807 = vsub.s32 %v1804, %v1806
    %v1808 = vrot.slane %v1800, %v1807
    %v1810 = vunpack.c.l.s4 1934713408
    %v1811 = vunpack.c.0.s8 %v1810
    %v1812 = vlaneseq
    %v1813 = vshrl.u32 %v1812, 7
    %v1814 = vsub.s32 %v1811, %v1813
    %v1815 = vrot.slane %v1801, %v1814
    %v1816 = vcombine.low %v1784, %v1799
    %v1817 = vcombine.high %v1784, %v1799
    %v1819 = vunpack.c.l.s4 1934713408
    %v1820 = vunpack.c.0.s8 %v1819
    %v1821 = vlaneseq
    %v1822 = vshrl.u32 %v1821, 7
    %v1823 = vsub.s32 %v1820, %v1822
    %v1824 = vrot.slane %v1816, %v1823
    %v1826 = vunpack.c.l.s4 1934713408
    %v1827 = vunpack.c.0.s8 %v1826
    %v1828 = vlaneseq
    %v1829 = vshrl.u32 %v1828, 7
    %v1830 = vsub.s32 %v1827, %v1829
    %v1831 = vrot.slane %v1817, %v1830
    %v1832 = vcombine.high %v1808, 0.0
    %v1833 = vcombine.high %v1815, 0.0
    %v1834 = vcombine.high %v1824, 0.0
    %v1835 = vcombine.high %v1831, 0.0
    %v1836 = vlaneseq
    %v1837 = vshrl.u32 %v1836, 7
    %v1838 = vsub.s32 0, %v1837
    %v1839 = vrot.slane %v1455, %v1838
    %1841 = vbcast.lane.b32.xlu0 %v1839, 256
    %v1842 = vpop.permute.xlu0 %1841
    %v1843 = vlaneseq
    %v1844 = vshrl.u32 %v1843, 7
    %v1845 = vsub.s32 1, %v1844
    %v1846 = vrot.slane %v1455, %v1845
    %1848 = vbcast.lane.b32.xlu0 %v1846, 256
    %v1849 = vpop.permute.xlu0 %1848
    %v1850 = vlaneseq
    %v1851 = vshrl.u32 %v1850, 7
    %v1852 = vsub.s32 2, %v1851
    %v1853 = vrot.slane %v1455, %v1852
    %1855 = vbcast.lane.b32.xlu0 %v1853, 256
    %v1856 = vpop.permute.xlu0 %1855
    %v1857 = vlaneseq
    %v1858 = vshrl.u32 %v1857, 7
    %v1859 = vsub.s32 3, %v1858
    %v1860 = vrot.slane %v1455, %v1859
    %1862 = vbcast.lane.b32.xlu0 %v1860, 256
    %v1863 = vpop.permute.xlu0 %1862
    %v1864 = vlaneseq
    %v1865 = vshrl.u32 %v1864, 7
    %v1866 = vsub.s32 4, %v1865
    %v1867 = vrot.slane %v1455, %v1866
    %1869 = vbcast.lane.b32.xlu0 %v1867, 256
    %v1870 = vpop.permute.xlu0 %1869
    %v1871 = vlaneseq
    %v1872 = vshrl.u32 %v1871, 7
    %v1873 = vsub.s32 5, %v1872
    %v1874 = vrot.slane %v1455, %v1873
    %1876 = vbcast.lane.b32.xlu0 %v1874, 256
    %v1877 = vpop.permute.xlu0 %1876
    %v1878 = vlaneseq
    %v1879 = vshrl.u32 %v1878, 7
    %v1880 = vsub.s32 6, %v1879
    %v1881 = vrot.slane %v1455, %v1880
    %1883 = vbcast.lane.b32.xlu0 %v1881, 256
    %v1884 = vpop.permute.xlu0 %1883
    %v1885 = vlaneseq
    %v1886 = vshrl.u32 %v1885, 7
    %v1887 = vsub.s32 7, %v1886
    %v1888 = vrot.slane %v1455, %v1887
    %1890 = vbcast.lane.b32.xlu0 %v1888, 256
    %v1891 = vpop.permute.xlu0 %1890
    %v1892 = vlaneseq
    %v1893 = vshrl.u32 %v1892, 7
    %v1894 = vsub.s32 0, %v1893
    %v1895 = vrot.slane %v1458, %v1894
    %1897 = vbcast.lane.b32.xlu0 %v1895, 256
    %v1898 = vpop.permute.xlu0 %1897
    %v1899 = vlaneseq
    %v1900 = vshrl.u32 %v1899, 7
    %v1901 = vsub.s32 1, %v1900
    %v1902 = vrot.slane %v1458, %v1901
    %1904 = vbcast.lane.b32.xlu0 %v1902, 256
    %v1905 = vpop.permute.xlu0 %1904
    %v1906 = vlaneseq
    %v1907 = vshrl.u32 %v1906, 7
    %v1908 = vsub.s32 2, %v1907
    %v1909 = vrot.slane %v1458, %v1908
    %1911 = vbcast.lane.b32.xlu0 %v1909, 256
    %v1912 = vpop.permute.xlu0 %1911
    %v1913 = vlaneseq
    %v1914 = vshrl.u32 %v1913, 7
    %v1915 = vsub.s32 3, %v1914
    %v1916 = vrot.slane %v1458, %v1915
    %1918 = vbcast.lane.b32.xlu0 %v1916, 256
    %v1919 = vpop.permute.xlu0 %1918
    %v1920 = vlaneseq
    %v1921 = vshrl.u32 %v1920, 7
    %v1922 = vsub.s32 4, %v1921
    %v1923 = vrot.slane %v1458, %v1922
    %1925 = vbcast.lane.b32.xlu0 %v1923, 256
    %v1926 = vpop.permute.xlu0 %1925
    %v1927 = vlaneseq
    %v1928 = vshrl.u32 %v1927, 7
    %v1929 = vsub.s32 5, %v1928
    %v1930 = vrot.slane %v1458, %v1929
    %1932 = vbcast.lane.b32.xlu0 %v1930, 256
    %v1933 = vpop.permute.xlu0 %1932
    %v1934 = vlaneseq
    %v1935 = vshrl.u32 %v1934, 7
    %v1936 = vsub.s32 6, %v1935
    %v1937 = vrot.slane %v1458, %v1936
    %1939 = vbcast.lane.b32.xlu0 %v1937, 256
    %v1940 = vpop.permute.xlu0 %1939
    %v1941 = vlaneseq
    %v1942 = vshrl.u32 %v1941, 7
    %v1943 = vsub.s32 7, %v1942
    %v1944 = vrot.slane %v1458, %v1943
    %1946 = vbcast.lane.b32.xlu0 %v1944, 256
    %v1947 = vpop.permute.xlu0 %1946
    %v1948 = vlaneseq
    %v1949 = vshrl.u32 %v1948, 7
    %v1950 = vsub.s32 0, %v1949
    %v1951 = vrot.slane %v1463, %v1950
    %1953 = vbcast.lane.b32.xlu0 %v1951, 256
    %v1954 = vpop.permute.xlu0 %1953
    %v1955 = vlaneseq
    %v1956 = vshrl.u32 %v1955, 7
    %v1957 = vsub.s32 1, %v1956
    %v1958 = vrot.slane %v1463, %v1957
    %1960 = vbcast.lane.b32.xlu0 %v1958, 256
    %v1961 = vpop.permute.xlu0 %1960
    %v1962 = vlaneseq
    %v1963 = vshrl.u32 %v1962, 7
    %v1964 = vsub.s32 2, %v1963
    %v1965 = vrot.slane %v1463, %v1964
    %1967 = vbcast.lane.b32.xlu0 %v1965, 256
    %v1968 = vpop.permute.xlu0 %1967
    %v1969 = vlaneseq
    %v1970 = vshrl.u32 %v1969, 7
    %v1971 = vsub.s32 3, %v1970
    %v1972 = vrot.slane %v1463, %v1971
    %1974 = vbcast.lane.b32.xlu0 %v1972, 256
    %v1975 = vpop.permute.xlu0 %1974
    %v1976 = vlaneseq
    %v1977 = vshrl.u32 %v1976, 7
    %v1978 = vsub.s32 4, %v1977
    %v1979 = vrot.slane %v1463, %v1978
    %1981 = vbcast.lane.b32.xlu0 %v1979, 256
    %v1982 = vpop.permute.xlu0 %1981
    %v1983 = vlaneseq
    %v1984 = vshrl.u32 %v1983, 7
    %v1985 = vsub.s32 5, %v1984
    %v1986 = vrot.slane %v1463, %v1985
    %1988 = vbcast.lane.b32.xlu0 %v1986, 256
    %v1989 = vpop.permute.xlu0 %1988
    %v1990 = vlaneseq
    %v1991 = vshrl.u32 %v1990, 7
    %v1992 = vsub.s32 6, %v1991
    %v1993 = vrot.slane %v1463, %v1992
    %1995 = vbcast.lane.b32.xlu0 %v1993, 256
    %v1996 = vpop.permute.xlu0 %1995
    %v1997 = vlaneseq
    %v1998 = vshrl.u32 %v1997, 7
    %v1999 = vsub.s32 7, %v1998
    %v2000 = vrot.slane %v1463, %v1999
    %2002 = vbcast.lane.b32.xlu0 %v2000, 256
    %v2003 = vpop.permute.xlu0 %2002
    %v2004 = vlaneseq
    %v2005 = vshrl.u32 %v2004, 7
    %v2006 = vsub.s32 0, %v2005
    %v2007 = vrot.slane %v1466, %v2006
    %2009 = vbcast.lane.b32.xlu0 %v2007, 256
    %v2010 = vpop.permute.xlu0 %2009
    %v2011 = vlaneseq
    %v2012 = vshrl.u32 %v2011, 7
    %v2013 = vsub.s32 1, %v2012
    %v2014 = vrot.slane %v1466, %v2013
    %2016 = vbcast.lane.b32.xlu0 %v2014, 256
    %v2017 = vpop.permute.xlu0 %2016
    %v2018 = vlaneseq
    %v2019 = vshrl.u32 %v2018, 7
    %v2020 = vsub.s32 2, %v2019
    %v2021 = vrot.slane %v1466, %v2020
    %2023 = vbcast.lane.b32.xlu0 %v2021, 256
    %v2024 = vpop.permute.xlu0 %2023
    %v2025 = vlaneseq
    %v2026 = vshrl.u32 %v2025, 7
    %v2027 = vsub.s32 3, %v2026
    %v2028 = vrot.slane %v1466, %v2027
    %2030 = vbcast.lane.b32.xlu0 %v2028, 256
    %v2031 = vpop.permute.xlu0 %2030
    %v2032 = vlaneseq
    %v2033 = vshrl.u32 %v2032, 7
    %v2034 = vsub.s32 4, %v2033
    %v2035 = vrot.slane %v1466, %v2034
    %2037 = vbcast.lane.b32.xlu0 %v2035, 256
    %v2038 = vpop.permute.xlu0 %2037
    %v2039 = vlaneseq
    %v2040 = vshrl.u32 %v2039, 7
    %v2041 = vsub.s32 5, %v2040
    %v2042 = vrot.slane %v1466, %v2041
    %2044 = vbcast.lane.b32.xlu0 %v2042, 256
    %v2045 = vpop.permute.xlu0 %2044
    %v2046 = vlaneseq
    %v2047 = vshrl.u32 %v2046, 7
    %v2048 = vsub.s32 6, %v2047
    %v2049 = vrot.slane %v1466, %v2048
    %2051 = vbcast.lane.b32.xlu0 %v2049, 256
    %v2052 = vpop.permute.xlu0 %2051
    %v2053 = vlaneseq
    %v2054 = vshrl.u32 %v2053, 7
    %v2055 = vsub.s32 7, %v2054
    %v2056 = vrot.slane %v1466, %v2055
    %2058 = vbcast.lane.b32.xlu0 %v2056, 256
    %v2059 = vpop.permute.xlu0 %2058
    %v2060 = vadd.f32 %v1610, %v1842
    %v2061 = vadd.f32 %v1634, %v1849
    %v2062 = vadd.f32 %v1617, %v1856
    %v2063 = vadd.f32 %v1635, %v1863
    %v2064 = vadd.f32 %v1626, %v1870
    %v2065 = vadd.f32 %v1636, %v1877
    %v2066 = vadd.f32 %v1633, %v1884
    %v2067 = vadd.f32 %v1637, %v1891
    %v2068 = vadd.f32 %v1676, %v1898
    %v2069 = vadd.f32 %v1700, %v1905
    %v2070 = vadd.f32 %v1683, %v1912
    %v2071 = vadd.f32 %v1701, %v1919
    %v2072 = vadd.f32 %v1692, %v1926
    %v2073 = vadd.f32 %v1702, %v1933
    %v2074 = vadd.f32 %v1699, %v1940
    %v2075 = vadd.f32 %v1703, %v1947
    %v2076 = vadd.f32 %v1742, %v1954
    %v2077 = vadd.f32 %v1766, %v1961
    %v2078 = vadd.f32 %v1749, %v1968
    %v2079 = vadd.f32 %v1767, %v1975
    %v2080 = vadd.f32 %v1758, %v1982
    %v2081 = vadd.f32 %v1768, %v1989
    %v2082 = vadd.f32 %v1765, %v1996
    %v2083 = vadd.f32 %v1769, %v2003
    %v2084 = vadd.f32 %v1808, %v2010
    %v2085 = vadd.f32 %v1832, %v2017
    %v2086 = vadd.f32 %v1815, %v2024
    %v2087 = vadd.f32 %v1833, %v2031
    %v2088 = vadd.f32 %v1824, %v2038
    %v2089 = vadd.f32 %v1834, %v2045
    %v2090 = vadd.f32 %v1831, %v2052
    %v2091 = vadd.f32 %v1835, %v2059
    %v2092 = vmax.f32 %v2060, 0.0
    %v2093 = vmax.f32 %v2061, 0.0
    %v2094 = vmax.f32 %v2062, 0.0
    %v2095 = vmax.f32 %v2063, 0.0
    %v2096 = vmax.f32 %v2064, 0.0
    %v2097 = vmax.f32 %v2065, 0.0
    %v2098 = vmax.f32 %v2066, 0.0
    %v2099 = vmax.f32 %v2067, 0.0
    %v2100 = vmax.f32 %v2068, 0.0
    %v2101 = vmax.f32 %v2069, 0.0
    %v2102 = vmax.f32 %v2070, 0.0
    %v2103 = vmax.f32 %v2071, 0.0
    %v2104 = vmax.f32 %v2072, 0.0
    %v2105 = vmax.f32 %v2073, 0.0
    %v2106 = vmax.f32 %v2074, 0.0
    %v2107 = vmax.f32 %v2075, 0.0
    %v2108 = vmax.f32 %v2076, 0.0
    %v2109 = vmax.f32 %v2077, 0.0
    %v2110 = vmax.f32 %v2078, 0.0
    %v2111 = vmax.f32 %v2079, 0.0
    %v2112 = vmax.f32 %v2080, 0.0
    %v2113 = vmax.f32 %v2081, 0.0
    %v2114 = vmax.f32 %v2082, 0.0
    %v2115 = vmax.f32 %v2083, 0.0
    %v2116 = vmax.f32 %v2084, 0.0
    %v2117 = vmax.f32 %v2085, 0.0
    %v2118 = vmax.f32 %v2086, 0.0
    %v2119 = vmax.f32 %v2087, 0.0
    %v2120 = vmax.f32 %v2088, 0.0
    %v2121 = vmax.f32 %v2089, 0.0
    %v2122 = vmax.f32 %v2090, 0.0
    %v2123 = vmax.f32 %v2091, 0.0
    %v2124 = vcombine.low %v2092, %v2094
    %v2126 = vunpack.c.l.s4 1983009808
    %v2127 = vunpack.c.0.s8 %v2126
    %v2128 = vlaneseq
    %v2129 = vshrl.u32 %v2128, 7
    %v2130 = vsub.s32 %v2127, %v2129
    %v2131 = vrot.slane %v2124, %v2130
    %v2132 = vcombine.low %v2093, %v2095
    %v2134 = vunpack.c.l.s4 1983009808
    %v2135 = vunpack.c.0.s8 %v2134
    %v2136 = vlaneseq
    %v2137 = vshrl.u32 %v2136, 7
    %v2138 = vsub.s32 %v2135, %v2137
    %v2139 = vrot.slane %v2132, %v2138
    %v2140 = vcombine.low %v2096, %v2098
    %v2142 = vunpack.c.l.s4 1983009808
    %v2143 = vunpack.c.0.s8 %v2142
    %v2144 = vlaneseq
    %v2145 = vshrl.u32 %v2144, 7
    %v2146 = vsub.s32 %v2143, %v2145
    %v2147 = vrot.slane %v2140, %v2146
    %v2148 = vcombine.low %v2097, %v2099
    %v2150 = vunpack.c.l.s4 1983009808
    %v2151 = vunpack.c.0.s8 %v2150
    %v2152 = vlaneseq
    %v2153 = vshrl.u32 %v2152, 7
    %v2154 = vsub.s32 %v2151, %v2153
    %v2155 = vrot.slane %v2148, %v2154
    %v2156 = vcombine.low %v2131, %v2139
    %v2158 = vunpack.c.l.s4 1934713408
    %v2159 = vunpack.c.0.s8 %v2158
    %v2160 = vlaneseq
    %v2161 = vshrl.u32 %v2160, 7
    %v2162 = vsub.s32 %v2159, %v2161
    %v2163 = vrot.slane %v2156, %v2162
    %v2164 = vcombine.low %v2147, %v2155
    %v2166 = vunpack.c.l.s4 1934713408
    %v2167 = vunpack.c.0.s8 %v2166
    %v2168 = vlaneseq
    %v2169 = vshrl.u32 %v2168, 7
    %v2170 = vsub.s32 %v2167, %v2169
    %v2171 = vrot.slane %v2164, %v2170
    %v2172 = vcombine.low %v2163, %v2171
    %v2173 = vcombine.high %v2163, %v2171
    %v2174 = vcombine.low %v2100, %v2102
    %v2176 = vunpack.c.l.s4 1983009808
    %v2177 = vunpack.c.0.s8 %v2176
    %v2178 = vlaneseq
    %v2179 = vshrl.u32 %v2178, 7
    %v2180 = vsub.s32 %v2177, %v2179
    %v2181 = vrot.slane %v2174, %v2180
    %v2182 = vcombine.low %v2101, %v2103
    %v2184 = vunpack.c.l.s4 1983009808
    %v2185 = vunpack.c.0.s8 %v2184
    %v2186 = vlaneseq
    %v2187 = vshrl.u32 %v2186, 7
    %v2188 = vsub.s32 %v2185, %v2187
    %v2189 = vrot.slane %v2182, %v2188
    %v2190 = vcombine.low %v2104, %v2106
    %v2192 = vunpack.c.l.s4 1983009808
    %v2193 = vunpack.c.0.s8 %v2192
    %v2194 = vlaneseq
    %v2195 = vshrl.u32 %v2194, 7
    %v2196 = vsub.s32 %v2193, %v2195
    %v2197 = vrot.slane %v2190, %v2196
    %v2198 = vcombine.low %v2105, %v2107
    %v2200 = vunpack.c.l.s4 1983009808
    %v2201 = vunpack.c.0.s8 %v2200
    %v2202 = vlaneseq
    %v2203 = vshrl.u32 %v2202, 7
    %v2204 = vsub.s32 %v2201, %v2203
    %v2205 = vrot.slane %v2198, %v2204
    %v2206 = vcombine.low %v2181, %v2189
    %v2208 = vunpack.c.l.s4 1934713408
    %v2209 = vunpack.c.0.s8 %v2208
    %v2210 = vlaneseq
    %v2211 = vshrl.u32 %v2210, 7
    %v2212 = vsub.s32 %v2209, %v2211
    %v2213 = vrot.slane %v2206, %v2212
    %v2214 = vcombine.low %v2197, %v2205
    %v2216 = vunpack.c.l.s4 1934713408
    %v2217 = vunpack.c.0.s8 %v2216
    %v2218 = vlaneseq
    %v2219 = vshrl.u32 %v2218, 7
    %v2220 = vsub.s32 %v2217, %v2219
    %v2221 = vrot.slane %v2214, %v2220
    %v2222 = vcombine.low %v2213, %v2221
    %v2223 = vcombine.high %v2213, %v2221
    %v2224 = vcombine.low %v2108, %v2110
    %v2226 = vunpack.c.l.s4 1983009808
    %v2227 = vunpack.c.0.s8 %v2226
    %v2228 = vlaneseq
    %v2229 = vshrl.u32 %v2228, 7
    %v2230 = vsub.s32 %v2227, %v2229
    %v2231 = vrot.slane %v2224, %v2230
    %v2232 = vcombine.low %v2109, %v2111
    %v2234 = vunpack.c.l.s4 1983009808
    %v2235 = vunpack.c.0.s8 %v2234
    %v2236 = vlaneseq
    %v2237 = vshrl.u32 %v2236, 7
    %v2238 = vsub.s32 %v2235, %v2237
    %v2239 = vrot.slane %v2232, %v2238
    %v2240 = vcombine.low %v2112, %v2114
    %v2242 = vunpack.c.l.s4 1983009808
    %v2243 = vunpack.c.0.s8 %v2242
    %v2244 = vlaneseq
    %v2245 = vshrl.u32 %v2244, 7
    %v2246 = vsub.s32 %v2243, %v2245
    %v2247 = vrot.slane %v2240, %v2246
    %v2248 = vcombine.low %v2113, %v2115
    %v2250 = vunpack.c.l.s4 1983009808
    %v2251 = vunpack.c.0.s8 %v2250
    %v2252 = vlaneseq
    %v2253 = vshrl.u32 %v2252, 7
    %v2254 = vsub.s32 %v2251, %v2253
    %v2255 = vrot.slane %v2248, %v2254
    %v2256 = vcombine.low %v2231, %v2239
    %v2258 = vunpack.c.l.s4 1934713408
    %v2259 = vunpack.c.0.s8 %v2258
    %v2260 = vlaneseq
    %v2261 = vshrl.u32 %v2260, 7
    %v2262 = vsub.s32 %v2259, %v2261
    %v2263 = vrot.slane %v2256, %v2262
    %v2264 = vcombine.low %v2247, %v2255
    %v2266 = vunpack.c.l.s4 1934713408
    %v2267 = vunpack.c.0.s8 %v2266
    %v2268 = vlaneseq
    %v2269 = vshrl.u32 %v2268, 7
    %v2270 = vsub.s32 %v2267, %v2269
    %v2271 = vrot.slane %v2264, %v2270
    %v2272 = vcombine.low %v2263, %v2271
    %v2273 = vcombine.high %v2263, %v2271
    %v2274 = vcombine.low %v2116, %v2118
    %v2276 = vunpack.c.l.s4 1983009808
    %v2277 = vunpack.c.0.s8 %v2276
    %v2278 = vlaneseq
    %v2279 = vshrl.u32 %v2278, 7
    %v2280 = vsub.s32 %v2277, %v2279
    %v2281 = vrot.slane %v2274, %v2280
    %v2282 = vcombine.low %v2117, %v2119
    %v2284 = vunpack.c.l.s4 1983009808
    %v2285 = vunpack.c.0.s8 %v2284
    %v2286 = vlaneseq
    %v2287 = vshrl.u32 %v2286, 7
    %v2288 = vsub.s32 %v2285, %v2287
    %v2289 = vrot.slane %v2282, %v2288
    %v2290 = vcombine.low %v2120, %v2122
    %v2292 = vunpack.c.l.s4 1983009808
    %v2293 = vunpack.c.0.s8 %v2292
    %v2294 = vlaneseq
    %v2295 = vshrl.u32 %v2294, 7
    %v2296 = vsub.s32 %v2293, %v2295
    %v2297 = vrot.slane %v2290, %v2296
    %v2298 = vcombine.low %v2121, %v2123
    %v2300 = vunpack.c.l.s4 1983009808
    %v2301 = vunpack.c.0.s8 %v2300
    %v2302 = vlaneseq
    %v2303 = vshrl.u32 %v2302, 7
    %v2304 = vsub.s32 %v2301, %v2303
    %v2305 = vrot.slane %v2298, %v2304
    %v2306 = vcombine.low %v2281, %v2289
    %v2308 = vunpack.c.l.s4 1934713408
    %v2309 = vunpack.c.0.s8 %v2308
    %v2310 = vlaneseq
    %v2311 = vshrl.u32 %v2310, 7
    %v2312 = vsub.s32 %v2309, %v2311
    %v2313 = vrot.slane %v2306, %v2312
    %v2314 = vcombine.low %v2297, %v2305
    %v2316 = vunpack.c.l.s4 1934713408
    %v2317 = vunpack.c.0.s8 %v2316
    %v2318 = vlaneseq
    %v2319 = vshrl.u32 %v2318, 7
    %v2320 = vsub.s32 %v2317, %v2319
    %v2321 = vrot.slane %v2314, %v2320
    %v2322 = vcombine.low %v2313, %v2321
    %v2323 = vcombine.high %v2313, %v2321
    %s2324 = scalar_lea.vmem [#allocation5], 112
    %v2325 = vld [vmem:[%s2324] sm:$0xf]
    %v2326 = vld [vmem:[%s2324 + $0x4] sm:$0xf]
    %v2327 = vpack.c.bf16 %v2222, %v2172
    %v2328 = vpack.c.bf16 %v2223, %v2173
    %v2329 = vpack.c.bf16 %v2322, %v2272
    %v2330 = vpack.c.bf16 %v2323, %v2273
    %s2331 = scalar_lea.vmem [#allocation7], 224
    %v2332 = vld [vmem:[%s2331] sm:$0xff]
    %v2333 = vld [vmem:[%s2331 + $0x8] sm:$0xff]
    %2335 = vset.pattern.permute.xlu0 0
    %2336 = vperm.xlu0 %2335, %v2332
    %v2337 = vpop.permute.xlu0 %2336
    %2340 = vset.pattern.permute.xlu0 0
    %2341 = vperm.xlu0 %2340, %v2333
    %v2342 = vpop.permute.xlu0 %2341
    %v2346 = vunpack.c.l.b16 %v2325
    %v2347 = vunpack.c.l.b16 %v2326
    %v2348 = vpack.c.b16 %v2347, %v2346
    %v2350 = vsel %vm1413, %v2348, 0
    %2352 = vmatprep.subr.bf16.mxu0 %v2328
    %2353 = vmatpush1.bf16.msra.mxu0 %v2327
    %2354 = vmatprep.subr.bf16.mxu0 %v2330
    %2355 = vmatpush1.bf16.msra.mxu0 %v2329
    %2356 = vmatprep.subr.bf16.mxu0 0
    %2357 = vmatpush1.bf16.msra.mxu0 0
    %2358 = vmatprep.subr.bf16.mxu0 0
    %2359 = vmatpush1.bf16.msra.mxu0 0
    %2360 = vmatprep.subr.bf16.mxu0 0
    %2361 = vmatpush1.bf16.msra.mxu0 0
    %2362 = vmatprep.subr.bf16.mxu0 0
    %2363 = vmatpush1.bf16.msra.mxu0 0
    %2364 = vmatprep.subr.bf16.mxu0 0
    %2365 = vmatpush1.bf16.msra.mxu0 0
    %2366 = vmatprep.subr.bf16.mxu0 0
    %2367 = vmatpush1.bf16.msra.mxu0 0
    %2368 = vmatprep.subr.bf16.mxu0 0
    %2369 = vmatpush1.bf16.msra.mxu0 0
    %2370 = vmatprep.subr.bf16.mxu0 0
    %2371 = vmatpush1.bf16.msra.mxu0 0
    %2372 = vmatprep.subr.bf16.mxu0 0
    %2373 = vmatpush1.bf16.msra.mxu0 0
    %2374 = vmatprep.subr.bf16.mxu0 0
    %2375 = vmatpush1.bf16.msra.mxu0 0
    %2376 = vmatprep.subr.bf16.mxu0 0
    %2377 = vmatpush1.bf16.msra.mxu0 0
    %2378 = vmatprep.subr.bf16.mxu0 0
    %2379 = vmatpush1.bf16.msra.mxu0 0
    %2380 = vmatprep.subr.bf16.mxu0 0
    %2381 = vmatpush1.bf16.msra.mxu0 0
    %2382 = vmatprep.subr.bf16.mxu0 0
    %2383 = vmatpush1.bf16.msra.mxu0 0
    %2384 = vmatprep.mubr.bf16.mxu0 0
    %2385 = vmatmul.mubr.bf16.gmra.mrb[0].mxu0 %v2350
    %v2386 = vpop.f32.mrb[0].mxu0
    %v2387 = vadd.f32 %v2337, %v2386
    %v2388 = vpop.f32.mrb[0].mxu0
    %v2389 = vadd.f32 %v2337, %v2388
    %v2390 = vpop.f32.mrb[0].mxu0
    %v2391 = vadd.f32 %v2342, %v2390
    %v2392 = vpop.f32.mrb[0].mxu0
    %v2393 = vadd.f32 %v2342, %v2392
    %2394 = vdwg.mxu0
    %v2395 = vmax.f32 %v2387, 0.0
    %v2396 = vmax.f32 %v2389, 0.0
    %v2397 = vmax.f32 %v2391, 0.0
    %v2398 = vmax.f32 %v2393, 0.0
    %s2399 = scalar_lea.vmem [#allocation5], 128
    %v2400 = vld [vmem:[%s2399] sm:$0xf]
    %v2401 = vld [vmem:[%s2399 + $0x4] sm:$0xf]
    %v2402 = vpack.c.bf16 %v2397, %v2395
    %v2403 = vpack.c.bf16 %v2398, %v2396
    %s2404 = scalar_lea.vmem [#allocation7], 256
    %v2405 = vld [vmem:[%s2404] sm:$0xff]
    %v2406 = vld [vmem:[%s2404 + $0x8] sm:$0xff]
    %2408 = vset.pattern.permute.xlu0 0
    %2409 = vperm.xlu0 %2408, %v2405
    %v2410 = vpop.permute.xlu0 %2409
    %2413 = vset.pattern.permute.xlu0 0
    %2414 = vperm.xlu0 %2413, %v2406
    %v2415 = vpop.permute.xlu0 %2414
    %v2419 = vunpack.c.l.b16 %v2400
    %v2420 = vunpack.c.l.b16 %v2401
    %v2421 = vpack.c.b16 %v2420, %v2419
    %v2423 = vsel %vm583, %v2421, 0
    %2425 = vmatprep.subr.bf16.mxu0 %v2403
    %2426 = vmatpush1.bf16.msra.mxu0 %v2402
    %2427 = vmatprep.subr.bf16.mxu0 0
    %2428 = vmatpush1.bf16.msra.mxu0 0
    %2429 = vmatprep.subr.bf16.mxu0 0
    %2430 = vmatpush1.bf16.msra.mxu0 0
    %2431 = vmatprep.subr.bf16.mxu0 0
    %2432 = vmatpush1.bf16.msra.mxu0 0
    %2433 = vmatprep.subr.bf16.mxu0 0
    %2434 = vmatpush1.bf16.msra.mxu0 0
    %2435 = vmatprep.subr.bf16.mxu0 0
    %2436 = vmatpush1.bf16.msra.mxu0 0
    %2437 = vmatprep.subr.bf16.mxu0 0
    %2438 = vmatpush1.bf16.msra.mxu0 0
    %2439 = vmatprep.subr.bf16.mxu0 0
    %2440 = vmatpush1.bf16.msra.mxu0 0
    %2441 = vmatprep.subr.bf16.mxu0 0
    %2442 = vmatpush1.bf16.msra.mxu0 0
    %2443 = vmatprep.subr.bf16.mxu0 0
    %2444 = vmatpush1.bf16.msra.mxu0 0
    %2445 = vmatprep.subr.bf16.mxu0 0
    %2446 = vmatpush1.bf16.msra.mxu0 0
    %2447 = vmatprep.subr.bf16.mxu0 0
    %2448 = vmatpush1.bf16.msra.mxu0 0
    %2449 = vmatprep.subr.bf16.mxu0 0
    %2450 = vmatpush1.bf16.msra.mxu0 0
    %2451 = vmatprep.subr.bf16.mxu0 0
    %2452 = vmatpush1.bf16.msra.mxu0 0
    %2453 = vmatprep.subr.bf16.mxu0 0
    %2454 = vmatpush1.bf16.msra.mxu0 0
    %2455 = vmatprep.subr.bf16.mxu0 0
    %2456 = vmatpush1.bf16.msra.mxu0 0
    %2457 = vmatprep.mubr.bf16.mxu0 0
    %2458 = vmatmul.mubr.bf16.gmra.mrb[0].mxu0 %v2423
    %v2459 = vpop.f32.mrb[0].mxu0
    %v2460 = vadd.f32 %v2410, %v2459
    %v2461 = vpop.f32.mrb[0].mxu0
    %v2462 = vadd.f32 %v2410, %v2461
    %v2463 = vpop.f32.mrb[0].mxu0
    %v2464 = vadd.f32 %v2415, %v2463
    %v2465 = vpop.f32.mrb[0].mxu0
    %v2466 = vadd.f32 %v2415, %v2465
    %2467 = vdwg.mxu0
    %v2468 = vmax.f32 %v2460, 0.0
    %v2469 = vmax.f32 %v2462, 0.0
    %v2470 = vmax.f32 %v2464, 0.0
    %v2471 = vmax.f32 %v2466, 0.0
    %s2472 = scalar_lea.vmem [#allocation5], 144
    %v2473 = vld [vmem:[%s2472] sm:$0xf]
    %v2474 = vpack.c.bf16 %v2470, %v2468
    %v2475 = vpack.c.bf16 %v2471, %v2469
    %s2476 = scalar_lea.vmem [#allocation7], 288
    %v2477 = vld [vmem:[%s2476] sm:$0xff]
    %2479 = vset.pattern.permute.xlu0 0
    %2480 = vperm.xlu0 %2479, %v2477
    %v2481 = vpop.permute.xlu0 %2480
    %v2484 = vsel %vm583, %v2473, 0
    %2486 = vmatprep.subr.bf16.mxu0 %v2475
    %2487 = vmatpush1.bf16.msra.mxu0 %v2474
    %2488 = vmatprep.subr.bf16.mxu0 0
    %2489 = vmatpush1.bf16.msra.mxu0 0
    %2490 = vmatprep.subr.bf16.mxu0 0
    %2491 = vmatpush1.bf16.msra.mxu0 0
    %2492 = vmatprep.subr.bf16.mxu0 0
    %2493 = vmatpush1.bf16.msra.mxu0 0
    %2494 = vmatprep.subr.bf16.mxu0 0
    %2495 = vmatpush1.bf16.msra.mxu0 0
    %2496 = vmatprep.subr.bf16.mxu0 0
    %2497 = vmatpush1.bf16.msra.mxu0 0
    %2498 = vmatprep.subr.bf16.mxu0 0
    %2499 = vmatpush1.bf16.msra.mxu0 0
    %2500 = vmatprep.subr.bf16.mxu0 0
    %2501 = vmatpush1.bf16.msra.mxu0 0
    %2502 = vmatprep.subr.bf16.mxu0 0
    %2503 = vmatpush1.bf16.msra.mxu0 0
    %2504 = vmatprep.subr.bf16.mxu0 0
    %2505 = vmatpush1.bf16.msra.mxu0 0
    %2506 = vmatprep.subr.bf16.mxu0 0
    %2507 = vmatpush1.bf16.msra.mxu0 0
    %2508 = vmatprep.subr.bf16.mxu0 0
    %2509 = vmatpush1.bf16.msra.mxu0 0
    %2510 = vmatprep.subr.bf16.mxu0 0
    %2511 = vmatpush1.bf16.msra.mxu0 0
    %2512 = vmatprep.subr.bf16.mxu0 0
    %2513 = vmatpush1.bf16.msra.mxu0 0
    %2514 = vmatprep.subr.bf16.mxu0 0
    %2515 = vmatpush1.bf16.msra.mxu0 0
    %2516 = vmatprep.subr.bf16.mxu0 0
    %2517 = vmatpush1.bf16.msra.mxu0 0
    %2518 = vmatprep.mubr.bf16.mxu0 0
    %2519 = vmatmul.mubr.bf16.gmra.mrb[0].mxu0 %v2484
    %v2520 = vpop.f32.mrb[0].mxu0
    %v2521 = vadd.f32 %v2481, %v2520
    %v2522 = vpop.f32.mrb[0].mxu0
    %v2523 = vadd.f32 %v2481, %v2522
    %v2524 = vpop.f32.mrb[0].mxu0
    %v2525 = vpop.f32.mrb[0].mxu0
    %2526 = vdwg.mxu0
    %v2527 = vmax.f32 %v2521, 0.0
    %v2528 = vmax.f32 %v2523, 0.0
    %s2529 = scalar_lea.vmem [#allocation5], 160
    %v2530 = vld [vmem:[%s2529] sm:$0xf]
    %v2531 = vpack.c.bf16 %v2527, %v2527
    %v2532 = vpack.c.bf16 %v2528, %v2528
    %s2533 = scalar_lea.vmem [#allocation7], 320
    %v2534 = vld [vmem:[%s2533] sm:$0xff]
    %2536 = vset.pattern.permute.xlu0 0
    %2537 = vperm.xlu0 %2536, %v2534
    %v2538 = vpop.permute.xlu0 %2537
    %v2541 = vsel %vm74, %v2530, 0
    %v2544 = vsel %vm78, %v2531, 0
    %v2547 = vsel %vm78, %v2532, 0
    %2549 = vmatprep.subr.bf16.mxu0 %v2547
    %2550 = vmatpush1.bf16.msra.mxu0 %v2544
    %2551 = vmatprep.subr.bf16.mxu0 0
    %2552 = vmatpush1.bf16.msra.mxu0 0
    %2553 = vmatprep.subr.bf16.mxu0 0
    %2554 = vmatpush1.bf16.msra.mxu0 0
    %2555 = vmatprep.subr.bf16.mxu0 0
    %2556 = vmatpush1.bf16.msra.mxu0 0
    %2557 = vmatprep.subr.bf16.mxu0 0
    %2558 = vmatpush1.bf16.msra.mxu0 0
    %2559 = vmatprep.subr.bf16.mxu0 0
    %2560 = vmatpush1.bf16.msra.mxu0 0
    %2561 = vmatprep.subr.bf16.mxu0 0
    %2562 = vmatpush1.bf16.msra.mxu0 0
    %2563 = vmatprep.subr.bf16.mxu0 0
    %2564 = vmatpush1.bf16.msra.mxu0 0
    %2565 = vmatprep.subr.bf16.mxu0 0
    %2566 = vmatpush1.bf16.msra.mxu0 0
    %2567 = vmatprep.subr.bf16.mxu0 0
    %2568 = vmatpush1.bf16.msra.mxu0 0
    %2569 = vmatprep.subr.bf16.mxu0 0
    %2570 = vmatpush1.bf16.msra.mxu0 0
    %2571 = vmatprep.subr.bf16.mxu0 0
    %2572 = vmatpush1.bf16.msra.mxu0 0
    %2573 = vmatprep.subr.bf16.mxu0 0
    %2574 = vmatpush1.bf16.msra.mxu0 0
    %2575 = vmatprep.subr.bf16.mxu0 0
    %2576 = vmatpush1.bf16.msra.mxu0 0
    %2577 = vmatprep.subr.bf16.mxu0 0
    %2578 = vmatpush1.bf16.msra.mxu0 0
    %2579 = vmatprep.subr.bf16.mxu0 0
    %2580 = vmatpush1.bf16.msra.mxu0 0
    %2581 = vmatprep.mubr.bf16.mxu0 0
    %2582 = vmatmul.mubr.bf16.gmra.mrb[0].mxu0 %v2541
    %v2583 = vpop.f32.mrb[0].mxu0
    %v2584 = vadd.f32 %v2538, %v2583
    %v2585 = vpop.f32.mrb[0].mxu0
    %v2586 = vadd.f32 %v2538, %v2585
    %v2587 = vpop.f32.mrb[0].mxu0
    %v2588 = vpop.f32.mrb[0].mxu0
    %2589 = vdwg.mxu0
    %v2590 = vxor.u32 %v2584, 2147483648
    %v2591 = vxor.u32 %v2586, 2147483648
    %v2592 = vmul.f32 %v2590, 1.442695
    %v2593 = vpow.pop %v2592
    %v2594 = vmul.f32 %v2591, 1.442695
    %v2595 = vpow.pop %v2594
    %v2596 = vadd.f32 %v2593, 1.0
    %v2597 = vadd.f32 %v2595, 1.0
    %v2598 = vrcp.pop %v2596
    %v2599 = vmul.f32 1.0, %v2598
    %v2600 = vrcp.pop %v2597
    %v2601 = vmul.f32 1.0, %v2600
    %v2604 = vcombine.low %v2599, %v2601
    %v2606 = vunpack.c.l.s4 1966171168
    %v2607 = vunpack.c.0.s8 %v2606
    %v2608 = vlaneseq
    %v2609 = vshrl.u32 %v2608, 7
    %v2610 = vsub.s32 %v2607, %v2609
    %v2611 = vrot.slane %v2604, %v2610
    %v2613 = vunpack.c.l.s4 1966171168
    %v2614 = vunpack.c.0.s8 %v2613
    %v2615 = vlaneseq
    %v2616 = vshrl.u32 %v2615, 7
    %v2617 = vsub.s32 %v2614, %v2616
    %v2618 = vrot.slane %v2611, %v2617
    %v2620 = vlaneseq
    %vm2621 = vcmp.ge.s32.totalorder %v2620, 0
    %vm2622 = vcmp.lt.s32.totalorder %v2620, 256
    %vm2623 = vmand %vm2621, %vm2622
    %2624 = vst.msk [vmem:[#allocation8] sm:$0x3] %vm2623, %v2618
    // Predicated region
    $region26: #{tpu_custom_call.1} parent=1 // pred_check
      _
    $region27: #{tpu_custom_call.1} parent=1 // pred_check_branch
      %2626 = sbr.rel (0) target = $region29
    $region28: #{tpu_custom_call.1} parent=1 // pred_region
      %s2628 = ssub.s32 32, 32
      %2629 = vsyncadd [#allocation4], %s2628
      %s2631 = sshll.u32 [#allocation8], 4
      %s2632 = int_to_ptr.vmem [resolvable:$true] %s2631
      %2634 = dma.vmem_to_hbm [thread:$0]  %s2632, 32, %s3, [#allocation4]
    $region29: #{tpu_custom_call.1} parent=1 // pred_fallthru
      _
    // Predicated region
    $region30: #{tpu_custom_call.1} parent=1 // pred_check
      _
    $region31: #{tpu_custom_call.1} parent=1 // pred_check_branch
      %2636 = sbr.rel (0) target = $region33
    $region32: #{tpu_custom_call.1} parent=1 // pred_region
      %2637 = dma.done [#allocation4], 32
    $region33: #{tpu_custom_call.1} parent=1 // pred_fallthru
      _
    %2638 = vsyncpa [#allocation3], 1
    %2639 = vsyncpa [#allocation6], 1
    %2640 = vsyncpa [#allocation4], 1

</llo_original>
